<compile_context>
chip_gen: v7x
topology: tpu7x:2x2x1
jax: 0.10.0
libtpu: 0.0.40
codegen_flags: <defaults>
</compile_context>

<pallas_src>
import jax
import jax.numpy as jnp
from jax.experimental import pallas as pl
from jax.experimental.pallas import tpu as pltpu


def _lstm_kernel(x_ref, wih_ref, whh_ref, b_ref, out_ref, hn_ref, cn_ref):
    T, TB, I = x_ref.shape
    H = whh_ref.shape[0]
    G = 4 * H

    # ---- Hoisted input projection: one MXU matmul for ALL T steps of this
    # batch tile.  (T, TB, I) -> (T*TB, I) merges leading dims only (last dim
    # unchanged, TB is a sublane multiple) so the reshape is a free shape-cast.
    x2 = x_ref[...].reshape(T * TB, I)
    gx = (jnp.dot(x2, wih_ref[...], preferred_element_type=jnp.float32)
          + b_ref[...]).reshape(T, TB, G)          # time-major: gx[t] contiguous

    whh = whh_ref[...]                             # (H, 4H), resident in vregs

    use_vpu_recurrence = H <= 32
    if use_vpu_recurrence:
        # Hoist the W_hh row broadcasts out of the time loop (JAX does not CSE
        # broadcast_in_dim).  H * (TB, 4H) f32 is tiny for H <= 32.
        whh_rows = [jnp.broadcast_to(whh[k:k + 1, :], (TB, G)) for k in range(H)]

    h = jnp.zeros((TB, H), jnp.float32)
    c = jnp.zeros((TB, H), jnp.float32)
    hs = []

    # TODO(synk): for long / dynamic T, replace the static unroll with
    # lax.fori_loop(..., unroll=4-8) over time chunks (gx computed per chunk
    # into a small VMEM scratch) to bound code size, vreg live ranges and the
    # gx footprint.  T is small & static for this module.
    for t in range(T):
        if use_vpu_recurrence:
            # Tiny H: keep the recurrent matvec on the VPU (lane-broadcast
            # multiply-adds against resident W_hh rows) so the serial chain
            # never waits on an MXU push/drain round trip.
            gates = gx[t]
            for k in range(H):
                gates = gates + h[:, k:k + 1] * whh_rows[k]
        else:
            # TODO(synk): for large H, pin W_hh in the MXU weight registers via
            # pltpu.matmul_push_rhs / matmul_acc_lhs / matmul_pop instead of
            # re-pushing the same RHS every timestep.
            gates = gx[t] + jnp.dot(h, whh, preferred_element_type=jnp.float32)

        # Gate columns were permuted to [i, f, o, g] in the wrapper so the
        # three sigmoid gates form one contiguous EUP slab.
        sig = jax.nn.sigmoid(gates[:, : 3 * H])
        i_g = sig[:, 0 * H:1 * H]
        f_g = sig[:, 1 * H:2 * H]
        o_g = sig[:, 2 * H:3 * H]
        g_g = jnp.tanh(gates[:, 3 * H:])
        c = f_g * c + i_g * g_g
        h = o_g * jnp.tanh(c)
        hs.append(h)

    # One dense store of the whole (T, TB, H) output slab; no per-step stores.
    out_ref[...] = jnp.stack(hs, axis=0).astype(out_ref.dtype)
    hn_ref[...] = h.astype(hn_ref.dtype)
    cn_ref[...] = c.astype(cn_ref.dtype)


def lstm_encoder_pallas(x_btI, w_ih, w_hh, b_ih, b_hh, *, batch_tile=8):
    """x_btI: (B, T, I) batch-first. w_ih: (4H, I), w_hh: (4H, H), biases: (4H,).

    Returns (output (B, T, H), h_n (1, B, H), c_n (1, B, H)), matching
    PyTorch nn.LSTM(num_layers=1, batch_first=True) with zero initial state.
    """
    B, T, I = x_btI.shape
    G = w_ih.shape[0]
    H = G // 4

    def reorder(cols):
        # PyTorch gate column order [i, f, g, o] -> [i, f, o, g] so the three
        # sigmoid gates are contiguous inside the kernel.
        return jnp.concatenate(
            [cols[..., :2 * H], cols[..., 3 * H:], cols[..., 2 * H:3 * H]],
            axis=-1)

    # TODO(synk): for MXU-throughput-bound sizes cast weights/x to bf16 and keep
    # f32 accumulation; kept f32 here to match PyTorch numerics bit-for-bit.
    wih_t = reorder(jnp.transpose(w_ih)).astype(jnp.float32)              # (I, 4H)
    whh_t = reorder(jnp.transpose(w_hh)).astype(jnp.float32)              # (H, 4H)
    bias = reorder((b_ih + b_hh).reshape(1, G)).astype(jnp.float32)       # (1, 4H)

    TB = max(8, batch_tile)                  # f32 sublane multiple
    TB = min(TB, ((B + 7) // 8) * 8)         # don't tile wider than padded batch
    B_pad = ((B + TB - 1) // TB) * TB
    nb = B_pad // TB

    # Time-major, batch-padded input (wrapper-side layout plumbing is free).
    x_tm = jnp.transpose(x_btI.astype(jnp.float32), (1, 0, 2))            # (T, B, I)
    x_tm = jnp.pad(x_tm, ((0, 0), (0, B_pad - B), (0, 0)))

    out_shapes = (
        jax.ShapeDtypeStruct((T, B_pad, H), jnp.float32),   # time-major output
        jax.ShapeDtypeStruct((B_pad, H), jnp.float32),      # h_n (padded batch)
        jax.ShapeDtypeStruct((B_pad, H), jnp.float32),      # c_n (padded batch)
    )

    in_specs = [
        pl.BlockSpec((T, TB, I), lambda b: (0, b, 0)),      # batch-tiled input
        pl.BlockSpec((I, G), lambda b: (0, 0)),             # weights resident
        pl.BlockSpec((H, G), lambda b: (0, 0)),
        pl.BlockSpec((1, G), lambda b: (0, 0)),
    ]
    out_specs = (
        pl.BlockSpec((T, TB, H), lambda b: (0, b, 0)),
        pl.BlockSpec((TB, H), lambda b: (b, 0)),
        pl.BlockSpec((TB, H), lambda b: (b, 0)),
    )

    # Explicit VMEM budget: per-tile working set (x, gx, out, state) with
    # double-buffering + weights, 2x headroom, capped below v7x's 64 MiB.
    per_tile = 4 * (T * TB * I + T * TB * G + T * TB * H + 2 * TB * H)
    weights = 4 * (I * G + H * G + G)
    vmem_bytes = int(min(max(4 * per_tile + 2 * weights, 8 << 20), 48 << 20))

    cost = pl.CostEstimate(
        flops=2 * B_pad * T * G * (I + H),
        transcendentals=5 * B_pad * T * H,
        bytes_accessed=4 * (B_pad * T * (I + H) + 2 * B_pad * H
                            + I * G + H * G + G),
    )

    out_tm, hn, cn = pl.pallas_call(
        _lstm_kernel,
        out_shape=out_shapes,
        grid=(nb,),
        in_specs=in_specs,
        out_specs=out_specs,
        compiler_params=pltpu.CompilerParams(
            dimension_semantics=("parallel",),
            vmem_limit_bytes=vmem_bytes),
        cost_estimate=cost,
    )(x_tm, wih_t, whh_t, bias)

    output = jnp.transpose(out_tm, (1, 0, 2))[:B]           # (B, T, H) batch-first
    return output, hn[:B][None], cn[:B][None]


def _orthogonal(key, shape):
    """Deterministic orthogonal init (analogous to torch.nn.init.orthogonal_)."""
    rows, cols = shape
    n = max(rows, cols)
    a = jax.random.normal(key, (n, n), dtype=jnp.float32)
    q, r = jnp.linalg.qr(a)
    q = q * jnp.sign(jnp.diagonal(r))[None, :]
    return q[:rows, :cols]


def make_encoder_params(key, input_size=4, hidden_units=8):
    k1, k2, k3, k4 = jax.random.split(key, 4)
    w_ih = _orthogonal(k1, (4 * hidden_units, input_size))
    w_hh = _orthogonal(k2, (4 * hidden_units, hidden_units))
    b_ih = jax.random.normal(k3, (4 * hidden_units,), dtype=jnp.float32)
    b_hh = jax.random.normal(k4, (4 * hidden_units,), dtype=jnp.float32)
    return w_ih, w_hh, b_ih, b_hh


def _lstm_reference(x, w_ih, w_hh, b_ih, b_hh):
    """Plain-JAX reference (lax.scan), PyTorch gate order [i, f, g, o]."""
    B, T, I = x.shape
    H = w_hh.shape[1]

    def step(carry, x_t):
        h, c = carry
        g = x_t @ w_ih.T + h @ w_hh.T + b_ih + b_hh
        i = jax.nn.sigmoid(g[:, 0 * H:1 * H])
        f = jax.nn.sigmoid(g[:, 1 * H:2 * H])
        gg = jnp.tanh(g[:, 2 * H:3 * H])
        o = jax.nn.sigmoid(g[:, 3 * H:4 * H])
        c_new = f * c + i * gg
        h_new = o * jnp.tanh(c_new)
        return (h_new, c_new), h_new

    init = (jnp.zeros((B, H), jnp.float32), jnp.zeros((B, H), jnp.float32))
    (h_n, c_n), outs = jax.lax.scan(step, init, jnp.transpose(x, (1, 0, 2)))
    return jnp.transpose(outs, (1, 0, 2)), h_n[None], c_n[None]


if __name__ == "__main__":
    # Module defaults: input_size=4, num_layers=1, hidden_units=8.
    B, T, I, H = 2, 8, 4, 8

    key = jax.random.PRNGKey(0)
    kx, kp = jax.random.split(key)
    x = jax.random.normal(kx, (B, T, I), dtype=jnp.float32)
    w_ih, w_hh, b_ih, b_hh = make_encoder_params(kp, input_size=I, hidden_units=H)

    output, hh, cc = jax.jit(lstm_encoder_pallas)(x, w_ih, w_hh, b_ih, b_hh)
    jax.block_until_ready((output, hh, cc))

    # sanity check against plain-JAX scan reference
    ref_out, ref_hh, ref_cc = _lstm_reference(x, w_ih, w_hh, b_ih, b_hh)
    assert output.shape == (B, T, H) and hh.shape == (1, B, H) and cc.shape == (1, B, H)
    assert jnp.allclose(output, ref_out, atol=1e-5)
    assert jnp.allclose(hh, ref_hh, atol=1e-5)
    assert jnp.allclose(cc, ref_cc, atol=1e-5)

    print("KERNEL_OK")
</pallas_src>

<mosaic_0001>
module attributes {stable_mosaic.version = 11 : i64} {
  func.func @_lstm_kernel(%arg0: i32, %arg1: memref<8x8x4xf32, #tpu.memory_space<vmem>>, %arg2: memref<4x32xf32, #tpu.memory_space<vmem>>, %arg3: memref<8x32xf32, #tpu.memory_space<vmem>>, %arg4: memref<1x32xf32, #tpu.memory_space<vmem>>, %arg5: memref<8x8x8xf32, #tpu.memory_space<vmem>>, %arg6: memref<8x8xf32, #tpu.memory_space<vmem>>, %arg7: memref<8x8xf32, #tpu.memory_space<vmem>>) attributes {dimension_semantics = [#tpu.dimension_semantics<parallel>], iteration_bounds = array<i64: 1>, scalar_prefetch = 0 : i64, scratch_operands = 0 : i64, tpu.core_type = #tpu.core_type<tc>, window_params = [{transform_indices = @transform_0, window_bounds = array<i64: 8, 8, 4>}, {pipeline_mode = #tpu.pipeline_mode<synchronous>, transform_indices = @transform_1, window_bounds = array<i64: 4, 32>}, {pipeline_mode = #tpu.pipeline_mode<synchronous>, transform_indices = @transform_2, window_bounds = array<i64: 8, 32>}, {pipeline_mode = #tpu.pipeline_mode<synchronous>, transform_indices = @transform_3, window_bounds = array<i64: 1, 32>}, {transform_indices = @transform_4, window_bounds = array<i64: 8, 8, 8>}, {transform_indices = @transform_5, window_bounds = array<i64: 8, 8>}, {transform_indices = @transform_6, window_bounds = array<i64: 8, 8>}]} {
    %c0 = arith.constant 0 : index
    %c0_0 = arith.constant 0 : index
    %c0_1 = arith.constant 0 : index
    %0 = vector.load %arg1[%c0, %c0_0, %c0_1] : memref<8x8x4xf32, #tpu.memory_space<vmem>>, vector<8x8x4xf32>
    %1 = vector.shape_cast %0 : vector<8x8x4xf32> to vector<64x4xf32>
    %c0_2 = arith.constant 0 : index
    %c0_3 = arith.constant 0 : index
    %2 = vector.load %arg2[%c0_2, %c0_3] : memref<4x32xf32, #tpu.memory_space<vmem>>, vector<4x32xf32>
    %cst = arith.constant dense<0.000000e+00> : vector<64x32xf32>
    %3 = tpu.matmul %1, %2, %cst {dimension_numbers = #tpu.dot_dimension_numbers<[1], [0], [0], [1], [0, 0, 1, 1], [], []>} : vector<64x4xf32>, vector<4x32xf32>, vector<64x32xf32> -> vector<64x32xf32>
    %c0_4 = arith.constant 0 : index
    %c0_5 = arith.constant 0 : index
    %4 = vector.load %arg4[%c0_4, %c0_5] : memref<1x32xf32, #tpu.memory_space<vmem>>, vector<1x32xf32>
    %5 = vector.broadcast %4 : vector<1x32xf32> to vector<64x32xf32>
    %6 = arith.addf %3, %5 : vector<64x32xf32>
    %7 = vector.shape_cast %6 : vector<64x32xf32> to vector<8x8x32xf32>
    %c0_6 = arith.constant 0 : index
    %c0_7 = arith.constant 0 : index
    %8 = vector.load %arg3[%c0_6, %c0_7] : memref<8x32xf32, #tpu.memory_space<vmem>>, vector<8x32xf32>
    %9 = vector.extract_strided_slice %8 {offsets = [0, 0], sizes = [1, 32], strides = [1, 1]} : vector<8x32xf32> to vector<1x32xf32>
    %10 = vector.shape_cast %9 : vector<1x32xf32> to vector<1x32xf32>
    %11 = vector.broadcast %10 : vector<1x32xf32> to vector<8x32xf32>
    %12 = vector.extract_strided_slice %8 {offsets = [1, 0], sizes = [1, 32], strides = [1, 1]} : vector<8x32xf32> to vector<1x32xf32>
    %13 = vector.shape_cast %12 : vector<1x32xf32> to vector<1x32xf32>
    %14 = vector.broadcast %13 : vector<1x32xf32> to vector<8x32xf32>
    %15 = vector.extract_strided_slice %8 {offsets = [2, 0], sizes = [1, 32], strides = [1, 1]} : vector<8x32xf32> to vector<1x32xf32>
    %16 = vector.shape_cast %15 : vector<1x32xf32> to vector<1x32xf32>
    %17 = vector.broadcast %16 : vector<1x32xf32> to vector<8x32xf32>
    %18 = vector.extract_strided_slice %8 {offsets = [3, 0], sizes = [1, 32], strides = [1, 1]} : vector<8x32xf32> to vector<1x32xf32>
    %19 = vector.shape_cast %18 : vector<1x32xf32> to vector<1x32xf32>
    %20 = vector.broadcast %19 : vector<1x32xf32> to vector<8x32xf32>
    %21 = vector.extract_strided_slice %8 {offsets = [4, 0], sizes = [1, 32], strides = [1, 1]} : vector<8x32xf32> to vector<1x32xf32>
    %22 = vector.shape_cast %21 : vector<1x32xf32> to vector<1x32xf32>
    %23 = vector.broadcast %22 : vector<1x32xf32> to vector<8x32xf32>
    %24 = vector.extract_strided_slice %8 {offsets = [5, 0], sizes = [1, 32], strides = [1, 1]} : vector<8x32xf32> to vector<1x32xf32>
    %25 = vector.shape_cast %24 : vector<1x32xf32> to vector<1x32xf32>
    %26 = vector.broadcast %25 : vector<1x32xf32> to vector<8x32xf32>
    %27 = vector.extract_strided_slice %8 {offsets = [6, 0], sizes = [1, 32], strides = [1, 1]} : vector<8x32xf32> to vector<1x32xf32>
    %28 = vector.shape_cast %27 : vector<1x32xf32> to vector<1x32xf32>
    %29 = vector.broadcast %28 : vector<1x32xf32> to vector<8x32xf32>
    %30 = vector.extract_strided_slice %8 {offsets = [7, 0], sizes = [1, 32], strides = [1, 1]} : vector<8x32xf32> to vector<1x32xf32>
    %31 = vector.shape_cast %30 : vector<1x32xf32> to vector<1x32xf32>
    %32 = vector.broadcast %31 : vector<1x32xf32> to vector<8x32xf32>
    %cst_8 = arith.constant 0.000000e+00 : f32
    %33 = vector.broadcast %cst_8 : f32 to vector<8x8xf32>
    %cst_9 = arith.constant 0.000000e+00 : f32
    %34 = vector.broadcast %cst_9 : f32 to vector<8x8xf32>
    %35 = vector.extract_strided_slice %7 {offsets = [0, 0, 0], sizes = [1, 8, 32], strides = [1, 1, 1]} : vector<8x8x32xf32> to vector<1x8x32xf32>
    %36 = vector.shape_cast %35 : vector<1x8x32xf32> to vector<8x32xf32>
    %37 = vector.extract_strided_slice %33 {offsets = [0, 0], sizes = [8, 1], strides = [1, 1]} : vector<8x8xf32> to vector<8x1xf32>
    %38 = vector.broadcast %37 : vector<8x1xf32> to vector<8x32xf32>
    %39 = arith.mulf %38, %11 : vector<8x32xf32>
    %40 = arith.addf %36, %39 : vector<8x32xf32>
    %41 = vector.extract_strided_slice %33 {offsets = [0, 1], sizes = [8, 1], strides = [1, 1]} : vector<8x8xf32> to vector<8x1xf32>
    %42 = vector.broadcast %41 : vector<8x1xf32> to vector<8x32xf32>
    %43 = arith.mulf %42, %14 : vector<8x32xf32>
    %44 = arith.addf %40, %43 : vector<8x32xf32>
    %45 = vector.extract_strided_slice %33 {offsets = [0, 2], sizes = [8, 1], strides = [1, 1]} : vector<8x8xf32> to vector<8x1xf32>
    %46 = vector.broadcast %45 : vector<8x1xf32> to vector<8x32xf32>
    %47 = arith.mulf %46, %17 : vector<8x32xf32>
    %48 = arith.addf %44, %47 : vector<8x32xf32>
    %49 = vector.extract_strided_slice %33 {offsets = [0, 3], sizes = [8, 1], strides = [1, 1]} : vector<8x8xf32> to vector<8x1xf32>
    %50 = vector.broadcast %49 : vector<8x1xf32> to vector<8x32xf32>
    %51 = arith.mulf %50, %20 : vector<8x32xf32>
    %52 = arith.addf %48, %51 : vector<8x32xf32>
    %53 = vector.extract_strided_slice %33 {offsets = [0, 4], sizes = [8, 1], strides = [1, 1]} : vector<8x8xf32> to vector<8x1xf32>
    %54 = vector.broadcast %53 : vector<8x1xf32> to vector<8x32xf32>
    %55 = arith.mulf %54, %23 : vector<8x32xf32>
    %56 = arith.addf %52, %55 : vector<8x32xf32>
    %57 = vector.extract_strided_slice %33 {offsets = [0, 5], sizes = [8, 1], strides = [1, 1]} : vector<8x8xf32> to vector<8x1xf32>
    %58 = vector.broadcast %57 : vector<8x1xf32> to vector<8x32xf32>
    %59 = arith.mulf %58, %26 : vector<8x32xf32>
    %60 = arith.addf %56, %59 : vector<8x32xf32>
    %61 = vector.extract_strided_slice %33 {offsets = [0, 6], sizes = [8, 1], strides = [1, 1]} : vector<8x8xf32> to vector<8x1xf32>
    %62 = vector.broadcast %61 : vector<8x1xf32> to vector<8x32xf32>
    %63 = arith.mulf %62, %29 : vector<8x32xf32>
    %64 = arith.addf %60, %63 : vector<8x32xf32>
    %65 = vector.extract_strided_slice %33 {offsets = [0, 7], sizes = [8, 1], strides = [1, 1]} : vector<8x8xf32> to vector<8x1xf32>
    %66 = vector.broadcast %65 : vector<8x1xf32> to vector<8x32xf32>
    %67 = arith.mulf %66, %32 : vector<8x32xf32>
    %68 = arith.addf %64, %67 : vector<8x32xf32>
    %69 = vector.extract_strided_slice %68 {offsets = [0, 0], sizes = [8, 24], strides = [1, 1]} : vector<8x32xf32> to vector<8x24xf32>
    %70 = arith.negf %69 : vector<8x24xf32>
    %71 = math.exp %70 : vector<8x24xf32>
    %cst_10 = arith.constant 1.000000e+00 : f32
    %72 = vector.broadcast %cst_10 : f32 to vector<8x24xf32>
    %73 = arith.addf %72, %71 : vector<8x24xf32>
    %74 = arith.divf %72, %73 : vector<8x24xf32>
    %75 = vector.extract_strided_slice %74 {offsets = [0, 0], sizes = [8, 8], strides = [1, 1]} : vector<8x24xf32> to vector<8x8xf32>
    %76 = vector.extract_strided_slice %74 {offsets = [0, 8], sizes = [8, 8], strides = [1, 1]} : vector<8x24xf32> to vector<8x8xf32>
    %77 = vector.extract_strided_slice %74 {offsets = [0, 16], sizes = [8, 8], strides = [1, 1]} : vector<8x24xf32> to vector<8x8xf32>
    %78 = vector.extract_strided_slice %68 {offsets = [0, 24], sizes = [8, 8], strides = [1, 1]} : vector<8x32xf32> to vector<8x8xf32>
    %79 = math.tanh %78 : vector<8x8xf32>
    %80 = arith.mulf %76, %34 : vector<8x8xf32>
    %81 = arith.mulf %75, %79 : vector<8x8xf32>
    %82 = arith.addf %80, %81 : vector<8x8xf32>
    %83 = math.tanh %82 : vector<8x8xf32>
    %84 = arith.mulf %77, %83 : vector<8x8xf32>
    %85 = vector.extract_strided_slice %7 {offsets = [1, 0, 0], sizes = [1, 8, 32], strides = [1, 1, 1]} : vector<8x8x32xf32> to vector<1x8x32xf32>
    %86 = vector.shape_cast %85 : vector<1x8x32xf32> to vector<8x32xf32>
    %87 = vector.extract_strided_slice %84 {offsets = [0, 0], sizes = [8, 1], strides = [1, 1]} : vector<8x8xf32> to vector<8x1xf32>
    %88 = vector.broadcast %87 : vector<8x1xf32> to vector<8x32xf32>
    %89 = arith.mulf %88, %11 : vector<8x32xf32>
    %90 = arith.addf %86, %89 : vector<8x32xf32>
    %91 = vector.extract_strided_slice %84 {offsets = [0, 1], sizes = [8, 1], strides = [1, 1]} : vector<8x8xf32> to vector<8x1xf32>
    %92 = vector.broadcast %91 : vector<8x1xf32> to vector<8x32xf32>
    %93 = arith.mulf %92, %14 : vector<8x32xf32>
    %94 = arith.addf %90, %93 : vector<8x32xf32>
    %95 = vector.extract_strided_slice %84 {offsets = [0, 2], sizes = [8, 1], strides = [1, 1]} : vector<8x8xf32> to vector<8x1xf32>
    %96 = vector.broadcast %95 : vector<8x1xf32> to vector<8x32xf32>
    %97 = arith.mulf %96, %17 : vector<8x32xf32>
    %98 = arith.addf %94, %97 : vector<8x32xf32>
    %99 = vector.extract_strided_slice %84 {offsets = [0, 3], sizes = [8, 1], strides = [1, 1]} : vector<8x8xf32> to vector<8x1xf32>
    %100 = vector.broadcast %99 : vector<8x1xf32> to vector<8x32xf32>
    %101 = arith.mulf %100, %20 : vector<8x32xf32>
    %102 = arith.addf %98, %101 : vector<8x32xf32>
    %103 = vector.extract_strided_slice %84 {offsets = [0, 4], sizes = [8, 1], strides = [1, 1]} : vector<8x8xf32> to vector<8x1xf32>
    %104 = vector.broadcast %103 : vector<8x1xf32> to vector<8x32xf32>
    %105 = arith.mulf %104, %23 : vector<8x32xf32>
    %106 = arith.addf %102, %105 : vector<8x32xf32>
    %107 = vector.extract_strided_slice %84 {offsets = [0, 5], sizes = [8, 1], strides = [1, 1]} : vector<8x8xf32> to vector<8x1xf32>
    %108 = vector.broadcast %107 : vector<8x1xf32> to vector<8x32xf32>
    %109 = arith.mulf %108, %26 : vector<8x32xf32>
    %110 = arith.addf %106, %109 : vector<8x32xf32>
    %111 = vector.extract_strided_slice %84 {offsets = [0, 6], sizes = [8, 1], strides = [1, 1]} : vector<8x8xf32> to vector<8x1xf32>
    %112 = vector.broadcast %111 : vector<8x1xf32> to vector<8x32xf32>
    %113 = arith.mulf %112, %29 : vector<8x32xf32>
    %114 = arith.addf %110, %113 : vector<8x32xf32>
    %115 = vector.extract_strided_slice %84 {offsets = [0, 7], sizes = [8, 1], strides = [1, 1]} : vector<8x8xf32> to vector<8x1xf32>
    %116 = vector.broadcast %115 : vector<8x1xf32> to vector<8x32xf32>
    %117 = arith.mulf %116, %32 : vector<8x32xf32>
    %118 = arith.addf %114, %117 : vector<8x32xf32>
    %119 = vector.extract_strided_slice %118 {offsets = [0, 0], sizes = [8, 24], strides = [1, 1]} : vector<8x32xf32> to vector<8x24xf32>
    %120 = arith.negf %119 : vector<8x24xf32>
    %121 = math.exp %120 : vector<8x24xf32>
    %cst_11 = arith.constant 1.000000e+00 : f32
    %122 = vector.broadcast %cst_11 : f32 to vector<8x24xf32>
    %123 = arith.addf %122, %121 : vector<8x24xf32>
    %124 = arith.divf %122, %123 : vector<8x24xf32>
    %125 = vector.extract_strided_slice %124 {offsets = [0, 0], sizes = [8, 8], strides = [1, 1]} : vector<8x24xf32> to vector<8x8xf32>
    %126 = vector.extract_strided_slice %124 {offsets = [0, 8], sizes = [8, 8], strides = [1, 1]} : vector<8x24xf32> to vector<8x8xf32>
    %127 = vector.extract_strided_slice %124 {offsets = [0, 16], sizes = [8, 8], strides = [1, 1]} : vector<8x24xf32> to vector<8x8xf32>
    %128 = vector.extract_strided_slice %118 {offsets = [0, 24], sizes = [8, 8], strides = [1, 1]} : vector<8x32xf32> to vector<8x8xf32>
    %129 = math.tanh %128 : vector<8x8xf32>
    %130 = arith.mulf %126, %82 : vector<8x8xf32>
    %131 = arith.mulf %125, %129 : vector<8x8xf32>
    %132 = arith.addf %130, %131 : vector<8x8xf32>
    %133 = math.tanh %132 : vector<8x8xf32>
    %134 = arith.mulf %127, %133 : vector<8x8xf32>
    %135 = vector.extract_strided_slice %7 {offsets = [2, 0, 0], sizes = [1, 8, 32], strides = [1, 1, 1]} : vector<8x8x32xf32> to vector<1x8x32xf32>
    %136 = vector.shape_cast %135 : vector<1x8x32xf32> to vector<8x32xf32>
    %137 = vector.extract_strided_slice %134 {offsets = [0, 0], sizes = [8, 1], strides = [1, 1]} : vector<8x8xf32> to vector<8x1xf32>
    %138 = vector.broadcast %137 : vector<8x1xf32> to vector<8x32xf32>
    %139 = arith.mulf %138, %11 : vector<8x32xf32>
    %140 = arith.addf %136, %139 : vector<8x32xf32>
    %141 = vector.extract_strided_slice %134 {offsets = [0, 1], sizes = [8, 1], strides = [1, 1]} : vector<8x8xf32> to vector<8x1xf32>
    %142 = vector.broadcast %141 : vector<8x1xf32> to vector<8x32xf32>
    %143 = arith.mulf %142, %14 : vector<8x32xf32>
    %144 = arith.addf %140, %143 : vector<8x32xf32>
    %145 = vector.extract_strided_slice %134 {offsets = [0, 2], sizes = [8, 1], strides = [1, 1]} : vector<8x8xf32> to vector<8x1xf32>
    %146 = vector.broadcast %145 : vector<8x1xf32> to vector<8x32xf32>
    %147 = arith.mulf %146, %17 : vector<8x32xf32>
    %148 = arith.addf %144, %147 : vector<8x32xf32>
    %149 = vector.extract_strided_slice %134 {offsets = [0, 3], sizes = [8, 1], strides = [1, 1]} : vector<8x8xf32> to vector<8x1xf32>
    %150 = vector.broadcast %149 : vector<8x1xf32> to vector<8x32xf32>
    %151 = arith.mulf %150, %20 : vector<8x32xf32>
    %152 = arith.addf %148, %151 : vector<8x32xf32>
    %153 = vector.extract_strided_slice %134 {offsets = [0, 4], sizes = [8, 1], strides = [1, 1]} : vector<8x8xf32> to vector<8x1xf32>
    %154 = vector.broadcast %153 : vector<8x1xf32> to vector<8x32xf32>
    %155 = arith.mulf %154, %23 : vector<8x32xf32>
    %156 = arith.addf %152, %155 : vector<8x32xf32>
    %157 = vector.extract_strided_slice %134 {offsets = [0, 5], sizes = [8, 1], strides = [1, 1]} : vector<8x8xf32> to vector<8x1xf32>
    %158 = vector.broadcast %157 : vector<8x1xf32> to vector<8x32xf32>
    %159 = arith.mulf %158, %26 : vector<8x32xf32>
    %160 = arith.addf %156, %159 : vector<8x32xf32>
    %161 = vector.extract_strided_slice %134 {offsets = [0, 6], sizes = [8, 1], strides = [1, 1]} : vector<8x8xf32> to vector<8x1xf32>
    %162 = vector.broadcast %161 : vector<8x1xf32> to vector<8x32xf32>
    %163 = arith.mulf %162, %29 : vector<8x32xf32>
    %164 = arith.addf %160, %163 : vector<8x32xf32>
    %165 = vector.extract_strided_slice %134 {offsets = [0, 7], sizes = [8, 1], strides = [1, 1]} : vector<8x8xf32> to vector<8x1xf32>
    %166 = vector.broadcast %165 : vector<8x1xf32> to vector<8x32xf32>
    %167 = arith.mulf %166, %32 : vector<8x32xf32>
    %168 = arith.addf %164, %167 : vector<8x32xf32>
    %169 = vector.extract_strided_slice %168 {offsets = [0, 0], sizes = [8, 24], strides = [1, 1]} : vector<8x32xf32> to vector<8x24xf32>
    %170 = arith.negf %169 : vector<8x24xf32>
    %171 = math.exp %170 : vector<8x24xf32>
    %cst_12 = arith.constant 1.000000e+00 : f32
    %172 = vector.broadcast %cst_12 : f32 to vector<8x24xf32>
    %173 = arith.addf %172, %171 : vector<8x24xf32>
    %174 = arith.divf %172, %173 : vector<8x24xf32>
    %175 = vector.extract_strided_slice %174 {offsets = [0, 0], sizes = [8, 8], strides = [1, 1]} : vector<8x24xf32> to vector<8x8xf32>
    %176 = vector.extract_strided_slice %174 {offsets = [0, 8], sizes = [8, 8], strides = [1, 1]} : vector<8x24xf32> to vector<8x8xf32>
    %177 = vector.extract_strided_slice %174 {offsets = [0, 16], sizes = [8, 8], strides = [1, 1]} : vector<8x24xf32> to vector<8x8xf32>
    %178 = vector.extract_strided_slice %168 {offsets = [0, 24], sizes = [8, 8], strides = [1, 1]} : vector<8x32xf32> to vector<8x8xf32>
    %179 = math.tanh %178 : vector<8x8xf32>
    %180 = arith.mulf %176, %132 : vector<8x8xf32>
    %181 = arith.mulf %175, %179 : vector<8x8xf32>
    %182 = arith.addf %180, %181 : vector<8x8xf32>
    %183 = math.tanh %182 : vector<8x8xf32>
    %184 = arith.mulf %177, %183 : vector<8x8xf32>
    %185 = vector.extract_strided_slice %7 {offsets = [3, 0, 0], sizes = [1, 8, 32], strides = [1, 1, 1]} : vector<8x8x32xf32> to vector<1x8x32xf32>
    %186 = vector.shape_cast %185 : vector<1x8x32xf32> to vector<8x32xf32>
    %187 = vector.extract_strided_slice %184 {offsets = [0, 0], sizes = [8, 1], strides = [1, 1]} : vector<8x8xf32> to vector<8x1xf32>
    %188 = vector.broadcast %187 : vector<8x1xf32> to vector<8x32xf32>
    %189 = arith.mulf %188, %11 : vector<8x32xf32>
    %190 = arith.addf %186, %189 : vector<8x32xf32>
    %191 = vector.extract_strided_slice %184 {offsets = [0, 1], sizes = [8, 1], strides = [1, 1]} : vector<8x8xf32> to vector<8x1xf32>
    %192 = vector.broadcast %191 : vector<8x1xf32> to vector<8x32xf32>
    %193 = arith.mulf %192, %14 : vector<8x32xf32>
    %194 = arith.addf %190, %193 : vector<8x32xf32>
    %195 = vector.extract_strided_slice %184 {offsets = [0, 2], sizes = [8, 1], strides = [1, 1]} : vector<8x8xf32> to vector<8x1xf32>
    %196 = vector.broadcast %195 : vector<8x1xf32> to vector<8x32xf32>
    %197 = arith.mulf %196, %17 : vector<8x32xf32>
    %198 = arith.addf %194, %197 : vector<8x32xf32>
    %199 = vector.extract_strided_slice %184 {offsets = [0, 3], sizes = [8, 1], strides = [1, 1]} : vector<8x8xf32> to vector<8x1xf32>
    %200 = vector.broadcast %199 : vector<8x1xf32> to vector<8x32xf32>
    %201 = arith.mulf %200, %20 : vector<8x32xf32>
    %202 = arith.addf %198, %201 : vector<8x32xf32>
    %203 = vector.extract_strided_slice %184 {offsets = [0, 4], sizes = [8, 1], strides = [1, 1]} : vector<8x8xf32> to vector<8x1xf32>
    %204 = vector.broadcast %203 : vector<8x1xf32> to vector<8x32xf32>
    %205 = arith.mulf %204, %23 : vector<8x32xf32>
    %206 = arith.addf %202, %205 : vector<8x32xf32>
    %207 = vector.extract_strided_slice %184 {offsets = [0, 5], sizes = [8, 1], strides = [1, 1]} : vector<8x8xf32> to vector<8x1xf32>
    %208 = vector.broadcast %207 : vector<8x1xf32> to vector<8x32xf32>
    %209 = arith.mulf %208, %26 : vector<8x32xf32>
    %210 = arith.addf %206, %209 : vector<8x32xf32>
    %211 = vector.extract_strided_slice %184 {offsets = [0, 6], sizes = [8, 1], strides = [1, 1]} : vector<8x8xf32> to vector<8x1xf32>
    %212 = vector.broadcast %211 : vector<8x1xf32> to vector<8x32xf32>
    %213 = arith.mulf %212, %29 : vector<8x32xf32>
    %214 = arith.addf %210, %213 : vector<8x32xf32>
    %215 = vector.extract_strided_slice %184 {offsets = [0, 7], sizes = [8, 1], strides = [1, 1]} : vector<8x8xf32> to vector<8x1xf32>
    %216 = vector.broadcast %215 : vector<8x1xf32> to vector<8x32xf32>
    %217 = arith.mulf %216, %32 : vector<8x32xf32>
    %218 = arith.addf %214, %217 : vector<8x32xf32>
    %219 = vector.extract_strided_slice %218 {offsets = [0, 0], sizes = [8, 24], strides = [1, 1]} : vector<8x32xf32> to vector<8x24xf32>
    %220 = arith.negf %219 : vector<8x24xf32>
    %221 = math.exp %220 : vector<8x24xf32>
    %cst_13 = arith.constant 1.000000e+00 : f32
    %222 = vector.broadcast %cst_13 : f32 to vector<8x24xf32>
    %223 = arith.addf %222, %221 : vector<8x24xf32>
    %224 = arith.divf %222, %223 : vector<8x24xf32>
    %225 = vector.extract_strided_slice %224 {offsets = [0, 0], sizes = [8, 8], strides = [1, 1]} : vector<8x24xf32> to vector<8x8xf32>
    %226 = vector.extract_strided_slice %224 {offsets = [0, 8], sizes = [8, 8], strides = [1, 1]} : vector<8x24xf32> to vector<8x8xf32>
    %227 = vector.extract_strided_slice %224 {offsets = [0, 16], sizes = [8, 8], strides = [1, 1]} : vector<8x24xf32> to vector<8x8xf32>
    %228 = vector.extract_strided_slice %218 {offsets = [0, 24], sizes = [8, 8], strides = [1, 1]} : vector<8x32xf32> to vector<8x8xf32>
    %229 = math.tanh %228 : vector<8x8xf32>
    %230 = arith.mulf %226, %182 : vector<8x8xf32>
    %231 = arith.mulf %225, %229 : vector<8x8xf32>
    %232 = arith.addf %230, %231 : vector<8x8xf32>
    %233 = math.tanh %232 : vector<8x8xf32>
    %234 = arith.mulf %227, %233 : vector<8x8xf32>
    %235 = vector.extract_strided_slice %7 {offsets = [4, 0, 0], sizes = [1, 8, 32], strides = [1, 1, 1]} : vector<8x8x32xf32> to vector<1x8x32xf32>
    %236 = vector.shape_cast %235 : vector<1x8x32xf32> to vector<8x32xf32>
    %237 = vector.extract_strided_slice %234 {offsets = [0, 0], sizes = [8, 1], strides = [1, 1]} : vector<8x8xf32> to vector<8x1xf32>
    %238 = vector.broadcast %237 : vector<8x1xf32> to vector<8x32xf32>
    %239 = arith.mulf %238, %11 : vector<8x32xf32>
    %240 = arith.addf %236, %239 : vector<8x32xf32>
    %241 = vector.extract_strided_slice %234 {offsets = [0, 1], sizes = [8, 1], strides = [1, 1]} : vector<8x8xf32> to vector<8x1xf32>
    %242 = vector.broadcast %241 : vector<8x1xf32> to vector<8x32xf32>
    %243 = arith.mulf %242, %14 : vector<8x32xf32>
    %244 = arith.addf %240, %243 : vector<8x32xf32>
    %245 = vector.extract_strided_slice %234 {offsets = [0, 2], sizes = [8, 1], strides = [1, 1]} : vector<8x8xf32> to vector<8x1xf32>
    %246 = vector.broadcast %245 : vector<8x1xf32> to vector<8x32xf32>
    %247 = arith.mulf %246, %17 : vector<8x32xf32>
    %248 = arith.addf %244, %247 : vector<8x32xf32>
    %249 = vector.extract_strided_slice %234 {offsets = [0, 3], sizes = [8, 1], strides = [1, 1]} : vector<8x8xf32> to vector<8x1xf32>
    %250 = vector.broadcast %249 : vector<8x1xf32> to vector<8x32xf32>
    %251 = arith.mulf %250, %20 : vector<8x32xf32>
    %252 = arith.addf %248, %251 : vector<8x32xf32>
    %253 = vector.extract_strided_slice %234 {offsets = [0, 4], sizes = [8, 1], strides = [1, 1]} : vector<8x8xf32> to vector<8x1xf32>
    %254 = vector.broadcast %253 : vector<8x1xf32> to vector<8x32xf32>
    %255 = arith.mulf %254, %23 : vector<8x32xf32>
    %256 = arith.addf %252, %255 : vector<8x32xf32>
    %257 = vector.extract_strided_slice %234 {offsets = [0, 5], sizes = [8, 1], strides = [1, 1]} : vector<8x8xf32> to vector<8x1xf32>
    %258 = vector.broadcast %257 : vector<8x1xf32> to vector<8x32xf32>
    %259 = arith.mulf %258, %26 : vector<8x32xf32>
    %260 = arith.addf %256, %259 : vector<8x32xf32>
    %261 = vector.extract_strided_slice %234 {offsets = [0, 6], sizes = [8, 1], strides = [1, 1]} : vector<8x8xf32> to vector<8x1xf32>
    %262 = vector.broadcast %261 : vector<8x1xf32> to vector<8x32xf32>
    %263 = arith.mulf %262, %29 : vector<8x32xf32>
    %264 = arith.addf %260, %263 : vector<8x32xf32>
    %265 = vector.extract_strided_slice %234 {offsets = [0, 7], sizes = [8, 1], strides = [1, 1]} : vector<8x8xf32> to vector<8x1xf32>
    %266 = vector.broadcast %265 : vector<8x1xf32> to vector<8x32xf32>
    %267 = arith.mulf %266, %32 : vector<8x32xf32>
    %268 = arith.addf %264, %267 : vector<8x32xf32>
    %269 = vector.extract_strided_slice %268 {offsets = [0, 0], sizes = [8, 24], strides = [1, 1]} : vector<8x32xf32> to vector<8x24xf32>
    %270 = arith.negf %269 : vector<8x24xf32>
    %271 = math.exp %270 : vector<8x24xf32>
    %cst_14 = arith.constant 1.000000e+00 : f32
    %272 = vector.broadcast %cst_14 : f32 to vector<8x24xf32>
    %273 = arith.addf %272, %271 : vector<8x24xf32>
    %274 = arith.divf %272, %273 : vector<8x24xf32>
    %275 = vector.extract_strided_slice %274 {offsets = [0, 0], sizes = [8, 8], strides = [1, 1]} : vector<8x24xf32> to vector<8x8xf32>
    %276 = vector.extract_strided_slice %274 {offsets = [0, 8], sizes = [8, 8], strides = [1, 1]} : vector<8x24xf32> to vector<8x8xf32>
    %277 = vector.extract_strided_slice %274 {offsets = [0, 16], sizes = [8, 8], strides = [1, 1]} : vector<8x24xf32> to vector<8x8xf32>
    %278 = vector.extract_strided_slice %268 {offsets = [0, 24], sizes = [8, 8], strides = [1, 1]} : vector<8x32xf32> to vector<8x8xf32>
    %279 = math.tanh %278 : vector<8x8xf32>
    %280 = arith.mulf %276, %232 : vector<8x8xf32>
    %281 = arith.mulf %275, %279 : vector<8x8xf32>
    %282 = arith.addf %280, %281 : vector<8x8xf32>
    %283 = math.tanh %282 : vector<8x8xf32>
    %284 = arith.mulf %277, %283 : vector<8x8xf32>
    %285 = vector.extract_strided_slice %7 {offsets = [5, 0, 0], sizes = [1, 8, 32], strides = [1, 1, 1]} : vector<8x8x32xf32> to vector<1x8x32xf32>
    %286 = vector.shape_cast %285 : vector<1x8x32xf32> to vector<8x32xf32>
    %287 = vector.extract_strided_slice %284 {offsets = [0, 0], sizes = [8, 1], strides = [1, 1]} : vector<8x8xf32> to vector<8x1xf32>
    %288 = vector.broadcast %287 : vector<8x1xf32> to vector<8x32xf32>
    %289 = arith.mulf %288, %11 : vector<8x32xf32>
    %290 = arith.addf %286, %289 : vector<8x32xf32>
    %291 = vector.extract_strided_slice %284 {offsets = [0, 1], sizes = [8, 1], strides = [1, 1]} : vector<8x8xf32> to vector<8x1xf32>
    %292 = vector.broadcast %291 : vector<8x1xf32> to vector<8x32xf32>
    %293 = arith.mulf %292, %14 : vector<8x32xf32>
    %294 = arith.addf %290, %293 : vector<8x32xf32>
    %295 = vector.extract_strided_slice %284 {offsets = [0, 2], sizes = [8, 1], strides = [1, 1]} : vector<8x8xf32> to vector<8x1xf32>
    %296 = vector.broadcast %295 : vector<8x1xf32> to vector<8x32xf32>
    %297 = arith.mulf %296, %17 : vector<8x32xf32>
    %298 = arith.addf %294, %297 : vector<8x32xf32>
    %299 = vector.extract_strided_slice %284 {offsets = [0, 3], sizes = [8, 1], strides = [1, 1]} : vector<8x8xf32> to vector<8x1xf32>
    %300 = vector.broadcast %299 : vector<8x1xf32> to vector<8x32xf32>
    %301 = arith.mulf %300, %20 : vector<8x32xf32>
    %302 = arith.addf %298, %301 : vector<8x32xf32>
    %303 = vector.extract_strided_slice %284 {offsets = [0, 4], sizes = [8, 1], strides = [1, 1]} : vector<8x8xf32> to vector<8x1xf32>
    %304 = vector.broadcast %303 : vector<8x1xf32> to vector<8x32xf32>
    %305 = arith.mulf %304, %23 : vector<8x32xf32>
    %306 = arith.addf %302, %305 : vector<8x32xf32>
    %307 = vector.extract_strided_slice %284 {offsets = [0, 5], sizes = [8, 1], strides = [1, 1]} : vector<8x8xf32> to vector<8x1xf32>
    %308 = vector.broadcast %307 : vector<8x1xf32> to vector<8x32xf32>
    %309 = arith.mulf %308, %26 : vector<8x32xf32>
    %310 = arith.addf %306, %309 : vector<8x32xf32>
    %311 = vector.extract_strided_slice %284 {offsets = [0, 6], sizes = [8, 1], strides = [1, 1]} : vector<8x8xf32> to vector<8x1xf32>
    %312 = vector.broadcast %311 : vector<8x1xf32> to vector<8x32xf32>
    %313 = arith.mulf %312, %29 : vector<8x32xf32>
    %314 = arith.addf %310, %313 : vector<8x32xf32>
    %315 = vector.extract_strided_slice %284 {offsets = [0, 7], sizes = [8, 1], strides = [1, 1]} : vector<8x8xf32> to vector<8x1xf32>
    %316 = vector.broadcast %315 : vector<8x1xf32> to vector<8x32xf32>
    %317 = arith.mulf %316, %32 : vector<8x32xf32>
    %318 = arith.addf %314, %317 : vector<8x32xf32>
    %319 = vector.extract_strided_slice %318 {offsets = [0, 0], sizes = [8, 24], strides = [1, 1]} : vector<8x32xf32> to vector<8x24xf32>
    %320 = arith.negf %319 : vector<8x24xf32>
    %321 = math.exp %320 : vector<8x24xf32>
    %cst_15 = arith.constant 1.000000e+00 : f32
    %322 = vector.broadcast %cst_15 : f32 to vector<8x24xf32>
    %323 = arith.addf %322, %321 : vector<8x24xf32>
    %324 = arith.divf %322, %323 : vector<8x24xf32>
    %325 = vector.extract_strided_slice %324 {offsets = [0, 0], sizes = [8, 8], strides = [1, 1]} : vector<8x24xf32> to vector<8x8xf32>
    %326 = vector.extract_strided_slice %324 {offsets = [0, 8], sizes = [8, 8], strides = [1, 1]} : vector<8x24xf32> to vector<8x8xf32>
    %327 = vector.extract_strided_slice %324 {offsets = [0, 16], sizes = [8, 8], strides = [1, 1]} : vector<8x24xf32> to vector<8x8xf32>
    %328 = vector.extract_strided_slice %318 {offsets = [0, 24], sizes = [8, 8], strides = [1, 1]} : vector<8x32xf32> to vector<8x8xf32>
    %329 = math.tanh %328 : vector<8x8xf32>
    %330 = arith.mulf %326, %282 : vector<8x8xf32>
    %331 = arith.mulf %325, %329 : vector<8x8xf32>
    %332 = arith.addf %330, %331 : vector<8x8xf32>
    %333 = math.tanh %332 : vector<8x8xf32>
    %334 = arith.mulf %327, %333 : vector<8x8xf32>
    %335 = vector.extract_strided_slice %7 {offsets = [6, 0, 0], sizes = [1, 8, 32], strides = [1, 1, 1]} : vector<8x8x32xf32> to vector<1x8x32xf32>
    %336 = vector.shape_cast %335 : vector<1x8x32xf32> to vector<8x32xf32>
    %337 = vector.extract_strided_slice %334 {offsets = [0, 0], sizes = [8, 1], strides = [1, 1]} : vector<8x8xf32> to vector<8x1xf32>
    %338 = vector.broadcast %337 : vector<8x1xf32> to vector<8x32xf32>
    %339 = arith.mulf %338, %11 : vector<8x32xf32>
    %340 = arith.addf %336, %339 : vector<8x32xf32>
    %341 = vector.extract_strided_slice %334 {offsets = [0, 1], sizes = [8, 1], strides = [1, 1]} : vector<8x8xf32> to vector<8x1xf32>
    %342 = vector.broadcast %341 : vector<8x1xf32> to vector<8x32xf32>
    %343 = arith.mulf %342, %14 : vector<8x32xf32>
    %344 = arith.addf %340, %343 : vector<8x32xf32>
    %345 = vector.extract_strided_slice %334 {offsets = [0, 2], sizes = [8, 1], strides = [1, 1]} : vector<8x8xf32> to vector<8x1xf32>
    %346 = vector.broadcast %345 : vector<8x1xf32> to vector<8x32xf32>
    %347 = arith.mulf %346, %17 : vector<8x32xf32>
    %348 = arith.addf %344, %347 : vector<8x32xf32>
    %349 = vector.extract_strided_slice %334 {offsets = [0, 3], sizes = [8, 1], strides = [1, 1]} : vector<8x8xf32> to vector<8x1xf32>
    %350 = vector.broadcast %349 : vector<8x1xf32> to vector<8x32xf32>
    %351 = arith.mulf %350, %20 : vector<8x32xf32>
    %352 = arith.addf %348, %351 : vector<8x32xf32>
    %353 = vector.extract_strided_slice %334 {offsets = [0, 4], sizes = [8, 1], strides = [1, 1]} : vector<8x8xf32> to vector<8x1xf32>
    %354 = vector.broadcast %353 : vector<8x1xf32> to vector<8x32xf32>
    %355 = arith.mulf %354, %23 : vector<8x32xf32>
    %356 = arith.addf %352, %355 : vector<8x32xf32>
    %357 = vector.extract_strided_slice %334 {offsets = [0, 5], sizes = [8, 1], strides = [1, 1]} : vector<8x8xf32> to vector<8x1xf32>
    %358 = vector.broadcast %357 : vector<8x1xf32> to vector<8x32xf32>
    %359 = arith.mulf %358, %26 : vector<8x32xf32>
    %360 = arith.addf %356, %359 : vector<8x32xf32>
    %361 = vector.extract_strided_slice %334 {offsets = [0, 6], sizes = [8, 1], strides = [1, 1]} : vector<8x8xf32> to vector<8x1xf32>
    %362 = vector.broadcast %361 : vector<8x1xf32> to vector<8x32xf32>
    %363 = arith.mulf %362, %29 : vector<8x32xf32>
    %364 = arith.addf %360, %363 : vector<8x32xf32>
    %365 = vector.extract_strided_slice %334 {offsets = [0, 7], sizes = [8, 1], strides = [1, 1]} : vector<8x8xf32> to vector<8x1xf32>
    %366 = vector.broadcast %365 : vector<8x1xf32> to vector<8x32xf32>
    %367 = arith.mulf %366, %32 : vector<8x32xf32>
    %368 = arith.addf %364, %367 : vector<8x32xf32>
    %369 = vector.extract_strided_slice %368 {offsets = [0, 0], sizes = [8, 24], strides = [1, 1]} : vector<8x32xf32> to vector<8x24xf32>
    %370 = arith.negf %369 : vector<8x24xf32>
    %371 = math.exp %370 : vector<8x24xf32>
    %cst_16 = arith.constant 1.000000e+00 : f32
    %372 = vector.broadcast %cst_16 : f32 to vector<8x24xf32>
    %373 = arith.addf %372, %371 : vector<8x24xf32>
    %374 = arith.divf %372, %373 : vector<8x24xf32>
    %375 = vector.extract_strided_slice %374 {offsets = [0, 0], sizes = [8, 8], strides = [1, 1]} : vector<8x24xf32> to vector<8x8xf32>
    %376 = vector.extract_strided_slice %374 {offsets = [0, 8], sizes = [8, 8], strides = [1, 1]} : vector<8x24xf32> to vector<8x8xf32>
    %377 = vector.extract_strided_slice %374 {offsets = [0, 16], sizes = [8, 8], strides = [1, 1]} : vector<8x24xf32> to vector<8x8xf32>
    %378 = vector.extract_strided_slice %368 {offsets = [0, 24], sizes = [8, 8], strides = [1, 1]} : vector<8x32xf32> to vector<8x8xf32>
    %379 = math.tanh %378 : vector<8x8xf32>
    %380 = arith.mulf %376, %332 : vector<8x8xf32>
    %381 = arith.mulf %375, %379 : vector<8x8xf32>
    %382 = arith.addf %380, %381 : vector<8x8xf32>
    %383 = math.tanh %382 : vector<8x8xf32>
    %384 = arith.mulf %377, %383 : vector<8x8xf32>
    %385 = vector.extract_strided_slice %7 {offsets = [7, 0, 0], sizes = [1, 8, 32], strides = [1, 1, 1]} : vector<8x8x32xf32> to vector<1x8x32xf32>
    %386 = vector.shape_cast %385 : vector<1x8x32xf32> to vector<8x32xf32>
    %387 = vector.extract_strided_slice %384 {offsets = [0, 0], sizes = [8, 1], strides = [1, 1]} : vector<8x8xf32> to vector<8x1xf32>
    %388 = vector.broadcast %387 : vector<8x1xf32> to vector<8x32xf32>
    %389 = arith.mulf %388, %11 : vector<8x32xf32>
    %390 = arith.addf %386, %389 : vector<8x32xf32>
    %391 = vector.extract_strided_slice %384 {offsets = [0, 1], sizes = [8, 1], strides = [1, 1]} : vector<8x8xf32> to vector<8x1xf32>
    %392 = vector.broadcast %391 : vector<8x1xf32> to vector<8x32xf32>
    %393 = arith.mulf %392, %14 : vector<8x32xf32>
    %394 = arith.addf %390, %393 : vector<8x32xf32>
    %395 = vector.extract_strided_slice %384 {offsets = [0, 2], sizes = [8, 1], strides = [1, 1]} : vector<8x8xf32> to vector<8x1xf32>
    %396 = vector.broadcast %395 : vector<8x1xf32> to vector<8x32xf32>
    %397 = arith.mulf %396, %17 : vector<8x32xf32>
    %398 = arith.addf %394, %397 : vector<8x32xf32>
    %399 = vector.extract_strided_slice %384 {offsets = [0, 3], sizes = [8, 1], strides = [1, 1]} : vector<8x8xf32> to vector<8x1xf32>
    %400 = vector.broadcast %399 : vector<8x1xf32> to vector<8x32xf32>
    %401 = arith.mulf %400, %20 : vector<8x32xf32>
    %402 = arith.addf %398, %401 : vector<8x32xf32>
    %403 = vector.extract_strided_slice %384 {offsets = [0, 4], sizes = [8, 1], strides = [1, 1]} : vector<8x8xf32> to vector<8x1xf32>
    %404 = vector.broadcast %403 : vector<8x1xf32> to vector<8x32xf32>
    %405 = arith.mulf %404, %23 : vector<8x32xf32>
    %406 = arith.addf %402, %405 : vector<8x32xf32>
    %407 = vector.extract_strided_slice %384 {offsets = [0, 5], sizes = [8, 1], strides = [1, 1]} : vector<8x8xf32> to vector<8x1xf32>
    %408 = vector.broadcast %407 : vector<8x1xf32> to vector<8x32xf32>
    %409 = arith.mulf %408, %26 : vector<8x32xf32>
    %410 = arith.addf %406, %409 : vector<8x32xf32>
    %411 = vector.extract_strided_slice %384 {offsets = [0, 6], sizes = [8, 1], strides = [1, 1]} : vector<8x8xf32> to vector<8x1xf32>
    %412 = vector.broadcast %411 : vector<8x1xf32> to vector<8x32xf32>
    %413 = arith.mulf %412, %29 : vector<8x32xf32>
    %414 = arith.addf %410, %413 : vector<8x32xf32>
    %415 = vector.extract_strided_slice %384 {offsets = [0, 7], sizes = [8, 1], strides = [1, 1]} : vector<8x8xf32> to vector<8x1xf32>
    %416 = vector.broadcast %415 : vector<8x1xf32> to vector<8x32xf32>
    %417 = arith.mulf %416, %32 : vector<8x32xf32>
    %418 = arith.addf %414, %417 : vector<8x32xf32>
    %419 = vector.extract_strided_slice %418 {offsets = [0, 0], sizes = [8, 24], strides = [1, 1]} : vector<8x32xf32> to vector<8x24xf32>
    %420 = arith.negf %419 : vector<8x24xf32>
    %421 = math.exp %420 : vector<8x24xf32>
    %cst_17 = arith.constant 1.000000e+00 : f32
    %422 = vector.broadcast %cst_17 : f32 to vector<8x24xf32>
    %423 = arith.addf %422, %421 : vector<8x24xf32>
    %424 = arith.divf %422, %423 : vector<8x24xf32>
    %425 = vector.extract_strided_slice %424 {offsets = [0, 0], sizes = [8, 8], strides = [1, 1]} : vector<8x24xf32> to vector<8x8xf32>
    %426 = vector.extract_strided_slice %424 {offsets = [0, 8], sizes = [8, 8], strides = [1, 1]} : vector<8x24xf32> to vector<8x8xf32>
    %427 = vector.extract_strided_slice %424 {offsets = [0, 16], sizes = [8, 8], strides = [1, 1]} : vector<8x24xf32> to vector<8x8xf32>
    %428 = vector.extract_strided_slice %418 {offsets = [0, 24], sizes = [8, 8], strides = [1, 1]} : vector<8x32xf32> to vector<8x8xf32>
    %429 = math.tanh %428 : vector<8x8xf32>
    %430 = arith.mulf %426, %382 : vector<8x8xf32>
    %431 = arith.mulf %425, %429 : vector<8x8xf32>
    %432 = arith.addf %430, %431 : vector<8x8xf32>
    %433 = math.tanh %432 : vector<8x8xf32>
    %434 = arith.mulf %427, %433 : vector<8x8xf32>
    %435 = vector.shape_cast %84 : vector<8x8xf32> to vector<1x8x8xf32>
    %436 = vector.shape_cast %134 : vector<8x8xf32> to vector<1x8x8xf32>
    %437 = vector.shape_cast %184 : vector<8x8xf32> to vector<1x8x8xf32>
    %438 = vector.shape_cast %234 : vector<8x8xf32> to vector<1x8x8xf32>
    %439 = vector.shape_cast %284 : vector<8x8xf32> to vector<1x8x8xf32>
    %440 = vector.shape_cast %334 : vector<8x8xf32> to vector<1x8x8xf32>
    %441 = vector.shape_cast %384 : vector<8x8xf32> to vector<1x8x8xf32>
    %442 = vector.shape_cast %434 : vector<8x8xf32> to vector<1x8x8xf32>
    %443 = tpu.concatenate %435, %436, %437, %438, %439, %440, %441, %442 in 0 : vector<1x8x8xf32>, vector<1x8x8xf32>, vector<1x8x8xf32>, vector<1x8x8xf32>, vector<1x8x8xf32>, vector<1x8x8xf32>, vector<1x8x8xf32>, vector<1x8x8xf32> -> vector<8x8x8xf32>
    %c0_18 = arith.constant 0 : index
    %c0_19 = arith.constant 0 : index
    %c0_20 = arith.constant 0 : index
    %444 = vector.load %arg5[%c0_18, %c0_19, %c0_20] : memref<8x8x8xf32, #tpu.memory_space<vmem>>, vector<8x8x8xf32>
    tpu.vector_store %arg5[%c0_18, %c0_19, %c0_20], %443 {strides = array<i32>} : memref<8x8x8xf32, #tpu.memory_space<vmem>>, vector<8x8x8xf32>,
    %c0_21 = arith.constant 0 : index
    %c0_22 = arith.constant 0 : index
    %445 = vector.load %arg6[%c0_21, %c0_22] : memref<8x8xf32, #tpu.memory_space<vmem>>, vector<8x8xf32>
    tpu.vector_store %arg6[%c0_21, %c0_22], %434 {strides = array<i32>} : memref<8x8xf32, #tpu.memory_space<vmem>>, vector<8x8xf32>,
    %c0_23 = arith.constant 0 : index
    %c0_24 = arith.constant 0 : index
    %446 = vector.load %arg7[%c0_23, %c0_24] : memref<8x8xf32, #tpu.memory_space<vmem>>, vector<8x8xf32>
    tpu.vector_store %arg7[%c0_23, %c0_24], %432 {strides = array<i32>} : memref<8x8xf32, #tpu.memory_space<vmem>>, vector<8x8xf32>,
    return
  }
  func.func @transform_0(%arg0: i32) -> (i32, i32, i32) {
    %c0_i32 = arith.constant 0 : i32
    %c0_i32_0 = arith.constant 0 : i32
    %c0_i32_1 = arith.constant 0 : i32
    return %c0_i32, %arg0, %c0_i32_0 : i32, i32, i32
  }
  func.func @transform_1(%arg0: i32) -> (i32, i32) {
    %c0_i32 = arith.constant 0 : i32
    %c0_i32_0 = arith.constant 0 : i32
    %c0_i32_1 = arith.constant 0 : i32
    return %c0_i32, %c0_i32_0 : i32, i32
  }
  func.func @transform_2(%arg0: i32) -> (i32, i32) {
    %c0_i32 = arith.constant 0 : i32
    %c0_i32_0 = arith.constant 0 : i32
    %c0_i32_1 = arith.constant 0 : i32
    return %c0_i32, %c0_i32_0 : i32, i32
  }
  func.func @transform_3(%arg0: i32) -> (i32, i32) {
    %c0_i32 = arith.constant 0 : i32
    %c0_i32_0 = arith.constant 0 : i32
    %c0_i32_1 = arith.constant 0 : i32
    return %c0_i32, %c0_i32_0 : i32, i32
  }
  func.func @transform_4(%arg0: i32) -> (i32, i32, i32) {
    %c0_i32 = arith.constant 0 : i32
    %c0_i32_0 = arith.constant 0 : i32
    %c0_i32_1 = arith.constant 0 : i32
    return %c0_i32, %arg0, %c0_i32_0 : i32, i32, i32
  }
  func.func @transform_5(%arg0: i32) -> (i32, i32) {
    %c0_i32 = arith.constant 0 : i32
    %c0_i32_0 = arith.constant 0 : i32
    return %arg0, %c0_i32 : i32, i32
  }
  func.func @transform_6(%arg0: i32) -> (i32, i32) {
    %c0_i32 = arith.constant 0 : i32
    %c0_i32_0 = arith.constant 0 : i32
    return %arg0, %c0_i32 : i32, i32
  }
}

</mosaic_0001>

<llo_original>
// kernel: lstm_encoder_pallas.1
$region0: #{lstm_encoder_pallas.1}
  #allocation0 [shape = 'u32[]', space=smem, size = 0x4, offset = 0x4, fixed_abs, tag = 'smem constant byte address 0x4 - core index']
  #allocation1 [shape = 'u32[144,128]{1,0:T(1,128)}', space=vmem, size = 0x12000, scoped, tag = 'internal scratch']
  %s0 = inlined_call_operand.vmem [shape: f32[8,8,4], index: 0, kind: input, shape index: {}]
  %s1 = inlined_call_operand.vmem [shape: f32[4,32], index: 1, kind: input, shape index: {}]
  %s2 = inlined_call_operand.vmem [shape: f32[8,32], index: 2, kind: input, shape index: {}]
  %s3 = inlined_call_operand.vmem [shape: f32[1,32], index: 3, kind: input, shape index: {}]
  %s4 = inlined_call_operand.vmem [shape: f32[8,8,8], index: 4, kind: output, shape index: {0}]
  %s5 = inlined_call_operand.vmem [shape: f32[8,8], index: 5, kind: output, shape index: {1}]
  %s6 = inlined_call_operand.vmem [shape: f32[8,8], index: 6, kind: output, shape index: {2}]
  %7 = xla_tuple %s4, %s5, %s6
  %s8 = sld [smem:[#allocation0]]
  $region42: #{lstm_encoder_pallas.1} parent=0
    _
  %s10 = ssub.s32 1, %s8
  %s11 = scalar_select 0, %s10, %s8
  // Predicated region
  $region2: #{lstm_encoder_pallas.1} parent=0 // pred_check
    _
  $region3: #{lstm_encoder_pallas.1} parent=0 // pred_check_branch
    %13 = sbr.rel (0) target = $region5
  $region4: #{lstm_encoder_pallas.1} parent=0 // pred_region
    _
  $region5: #{lstm_encoder_pallas.1} parent=0 // pred_fallthru
    _
  // Predicated region
  $region6: #{lstm_encoder_pallas.1} parent=0 // pred_check
    _
  $region7: #{lstm_encoder_pallas.1} parent=0 // pred_check_branch
    %15 = sbr.rel (0) target = $region9
  $region8: #{lstm_encoder_pallas.1} parent=0 // pred_region
    _
  $region9: #{lstm_encoder_pallas.1} parent=0 // pred_fallthru
    _
  // Predicated region
  $region10: #{lstm_encoder_pallas.1} parent=0 // pred_check
    _
  $region11: #{lstm_encoder_pallas.1} parent=0 // pred_check_branch
    %17 = sbr.rel (0) target = $region13
  $region12: #{lstm_encoder_pallas.1} parent=0 // pred_region
    _
  $region13: #{lstm_encoder_pallas.1} parent=0 // pred_fallthru
    _
  // Predicated region
  $region14: #{lstm_encoder_pallas.1} parent=0 // pred_check
    _
  $region15: #{lstm_encoder_pallas.1} parent=0 // pred_check_branch
    %19 = sbr.rel (0) target = $region17
  $region16: #{lstm_encoder_pallas.1} parent=0 // pred_region
    _
  $region17: #{lstm_encoder_pallas.1} parent=0 // pred_fallthru
    _
  %v20 = vld [vmem:[%s0] sm:$0xff]
  %v21 = vld [vmem:[%s0 + $0x8] sm:$0xff]
  %v22 = vld [vmem:[%s0 + $0x10] sm:$0xff]
  %v23 = vld [vmem:[%s0 + $0x18] sm:$0xff]
  %v24 = vld [vmem:[%s0 + $0x20] sm:$0xff]
  %v25 = vld [vmem:[%s0 + $0x28] sm:$0xff]
  %v26 = vld [vmem:[%s0 + $0x30] sm:$0xff]
  %v27 = vld [vmem:[%s0 + $0x38] sm:$0xff]
  %v28 = vld [vmem:[%s1] sm:$0xf]
  %v29 = vld [vmem:[%s3] sm:$0x1]
  %v31 = vlaneseq
  %v32 = vshrl.u32 %v31, 7
  %v33 = vsub.s32 0, %v32
  %v34 = vrot.slane %v29, %v33
  %vm36 = vcmask 31744
  %v38 = vsel %vm36, %v20, 0
  %v41 = vsel %vm36, %v21, 0
  %v44 = vsel %vm36, %v22, 0
  %v47 = vsel %vm36, %v23, 0
  %v50 = vsel %vm36, %v24, 0
  %v53 = vsel %vm36, %v25, 0
  %v56 = vsel %vm36, %v26, 0
  %v59 = vsel %vm36, %v27, 0
  %vm61 = vcmask 1043456
  %v63 = vsel %vm61, %v28, 0
  %65 = vmatprep.subr.mxu0 0.0
  %66 = vmatpush1.msra.mxu0 %v63
  %67 = vmatprep.subr.mxu0 0.0
  %68 = vmatpush1.msra.mxu0 0.0
  %69 = vmatprep.subr.mxu0 0.0
  %70 = vmatpush1.msra.mxu0 0.0
  %71 = vmatprep.subr.mxu0 0.0
  %72 = vmatpush1.msra.mxu0 0.0
  %73 = vmatprep.subr.mxu0 0.0
  %74 = vmatpush1.msra.mxu0 0.0
  %75 = vmatprep.subr.mxu0 0.0
  %76 = vmatpush1.msra.mxu0 0.0
  %77 = vmatprep.subr.mxu0 0.0
  %78 = vmatpush1.msra.mxu0 0.0
  %79 = vmatprep.subr.mxu0 0.0
  %80 = vmatpush1.msra.mxu0 0.0
  %81 = vmatprep.subr.mxu0 0.0
  %82 = vmatpush1.msra.mxu0 0.0
  %83 = vmatprep.subr.mxu0 0.0
  %84 = vmatpush1.msra.mxu0 0.0
  %85 = vmatprep.subr.mxu0 0.0
  %86 = vmatpush1.msra.mxu0 0.0
  %87 = vmatprep.subr.mxu0 0.0
  %88 = vmatpush1.msra.mxu0 0.0
  %89 = vmatprep.subr.mxu0 0.0
  %90 = vmatpush1.msra.mxu0 0.0
  %91 = vmatprep.subr.mxu0 0.0
  %92 = vmatpush1.msra.mxu0 0.0
  %93 = vmatprep.subr.mxu0 0.0
  %94 = vmatpush1.msra.mxu0 0.0
  %95 = vmatprep.subr.mxu0 0.0
  %96 = vmatpush1.msra.mxu0 0.0
  %97 = vmatprep.subr.mxu0 0.0
  %98 = vmatpush1.msra.mxu0 0.0
  %99 = vmatprep.subr.mxu0 0.0
  %100 = vmatpush1.msra.mxu0 0.0
  %101 = vmatprep.subr.mxu0 0.0
  %102 = vmatpush1.msra.mxu0 0.0
  %103 = vmatprep.subr.mxu0 0.0
  %104 = vmatpush1.msra.mxu0 0.0
  %105 = vmatprep.subr.mxu0 0.0
  %106 = vmatpush1.msra.mxu0 0.0
  %107 = vmatprep.subr.mxu0 0.0
  %108 = vmatpush1.msra.mxu0 0.0
  %109 = vmatprep.subr.mxu0 0.0
  %110 = vmatpush1.msra.mxu0 0.0
  %111 = vmatprep.subr.mxu0 0.0
  %112 = vmatpush1.msra.mxu0 0.0
  %113 = vmatprep.subr.mxu0 0.0
  %114 = vmatpush1.msra.mxu0 0.0
  %115 = vmatprep.subr.mxu0 0.0
  %116 = vmatpush1.msra.mxu0 0.0
  %117 = vmatprep.subr.mxu0 0.0
  %118 = vmatpush1.msra.mxu0 0.0
  %119 = vmatprep.subr.mxu0 0.0
  %120 = vmatpush1.msra.mxu0 0.0
  %121 = vmatprep.subr.mxu0 0.0
  %122 = vmatpush1.msra.mxu0 0.0
  %123 = vmatprep.subr.mxu0 0.0
  %124 = vmatpush1.msra.mxu0 0.0
  %125 = vmatprep.subr.mxu0 0.0
  %126 = vmatpush1.msra.mxu0 0.0
  %127 = vmatprep.subr.mxu0 0.0
  %128 = vmatpush1.msra.mxu0 0.0
  %129 = vmatprep.mubr.f32.mxu0 0.0
  %130 = vmatmul.mubr.f32.gmra.mrb[0].mxu0 %v38
  %v131 = vpop.f32.mrb[0].mxu0
  %v132 = vadd.f32 %v34, %v131
  %v133 = vpop.f32.mrb[0].mxu0
  %134 = vmatprep.mubr.f32.mxu0 0.0
  %135 = vmatmul.mubr.f32.gmra.mrb[0].mxu0 %v41
  %v136 = vpop.f32.mrb[0].mxu0
  %v137 = vadd.f32 %v34, %v136
  %v138 = vpop.f32.mrb[0].mxu0
  %139 = vmatprep.mubr.f32.mxu0 0.0
  %140 = vmatmul.mubr.f32.gmra.mrb[0].mxu0 %v44
  %v141 = vpop.f32.mrb[0].mxu0
  %v142 = vadd.f32 %v34, %v141
  %v143 = vpop.f32.mrb[0].mxu0
  %144 = vmatprep.mubr.f32.mxu0 0.0
  %145 = vmatmul.mubr.f32.gmra.mrb[0].mxu0 %v47
  %v146 = vpop.f32.mrb[0].mxu0
  %v147 = vadd.f32 %v34, %v146
  %v148 = vpop.f32.mrb[0].mxu0
  %149 = vmatprep.mubr.f32.mxu0 0.0
  %150 = vmatmul.mubr.f32.gmra.mrb[0].mxu0 %v50
  %v151 = vpop.f32.mrb[0].mxu0
  %v152 = vadd.f32 %v34, %v151
  %v153 = vpop.f32.mrb[0].mxu0
  %154 = vmatprep.mubr.f32.mxu0 0.0
  %155 = vmatmul.mubr.f32.gmra.mrb[0].mxu0 %v53
  %v156 = vpop.f32.mrb[0].mxu0
  %v157 = vadd.f32 %v34, %v156
  %v158 = vpop.f32.mrb[0].mxu0
  %159 = vmatprep.mubr.f32.mxu0 0.0
  %160 = vmatmul.mubr.f32.gmra.mrb[0].mxu0 %v56
  %v161 = vpop.f32.mrb[0].mxu0
  %v162 = vadd.f32 %v34, %v161
  %v163 = vpop.f32.mrb[0].mxu0
  %164 = vmatprep.mubr.f32.mxu0 0.0
  %165 = vmatmul.mubr.f32.gmra.mrb[0].mxu0 %v59
  %v166 = vpop.f32.mrb[0].mxu0
  %v167 = vadd.f32 %v34, %v166
  %v168 = vpop.f32.mrb[0].mxu0
  %169 = vdwg.mxu0
  %v170 = vld [vmem:[%s2] sm:$0xff]
  %v171 = vlaneseq
  %v172 = vshrl.u32 %v171, 7
  %v173 = vsub.s32 0, %v172
  %v174 = vrot.slane %v170, %v173
  %v175 = vlaneseq
  %v176 = vshrl.u32 %v175, 7
  %v177 = vsub.s32 1, %v176
  %v178 = vrot.slane %v170, %v177
  %v179 = vlaneseq
  %v180 = vshrl.u32 %v179, 7
  %v181 = vsub.s32 2, %v180
  %v182 = vrot.slane %v170, %v181
  %v183 = vlaneseq
  %v184 = vshrl.u32 %v183, 7
  %v185 = vsub.s32 3, %v184
  %v186 = vrot.slane %v170, %v185
  %v187 = vlaneseq
  %v188 = vshrl.u32 %v187, 7
  %v189 = vsub.s32 4, %v188
  %v190 = vrot.slane %v170, %v189
  %v191 = vlaneseq
  %v192 = vshrl.u32 %v191, 7
  %v193 = vsub.s32 5, %v192
  %v194 = vrot.slane %v170, %v193
  %v195 = vlaneseq
  %v196 = vshrl.u32 %v195, 7
  %v197 = vsub.s32 6, %v196
  %v198 = vrot.slane %v170, %v197
  %v199 = vlaneseq
  %v200 = vshrl.u32 %v199, 7
  %v201 = vsub.s32 7, %v200
  %v202 = vrot.slane %v170, %v201
  %v203 = vmul.f32 %v174, 0.0
  %v204 = vadd.f32 %v132, %v203
  %v205 = vmul.f32 %v178, 0.0
  %v206 = vadd.f32 %v204, %v205
  %v207 = vmul.f32 %v182, 0.0
  %v208 = vadd.f32 %v206, %v207
  %v209 = vmul.f32 %v186, 0.0
  %v210 = vadd.f32 %v208, %v209
  %v211 = vmul.f32 %v190, 0.0
  %v212 = vadd.f32 %v210, %v211
  %v213 = vmul.f32 %v194, 0.0
  %v214 = vadd.f32 %v212, %v213
  %v215 = vmul.f32 %v198, 0.0
  %v216 = vadd.f32 %v214, %v215
  %v217 = vmul.f32 %v202, 0.0
  %v218 = vadd.f32 %v216, %v217
  %v219 = vxor.u32 %v218, 2147483648
  %v220 = vmul.f32 %v219, 1.442695
  %v221 = vpow.pop %v220
  %v222 = vadd.f32 %v221, 1.0
  %v223 = vrcp.pop %v222
  %v224 = vmul.f32 1.0, %v223
  %v225 = vtanh.pop %v218
  %v226 = vmul.f32 %v224, 0.0
  %228 = vrot.lane.b32.xlu0 %v225, 104
  %v229 = vpop.permute.xlu0 %228
  %v231 = vmul.f32 %v224, %v229
  %233 = vrot.lane.b32.xlu0 %v231, 8
  %v234 = vpop.permute.xlu0 %233
  %v236 = vadd.f32 %v226, %v234
  %v237 = vtanh.pop %v236
  %239 = vrot.lane.b32.xlu0 %v237, 8
  %v240 = vpop.permute.xlu0 %239
  %v242 = vmul.f32 %v224, %v240
  %244 = vset.pattern.permute.xlu0 16
  %245 = vperm.xlu0 %244, %v242
  %v246 = vpop.permute.xlu0 %245
  %v248 = vmul.f32 %v246, %v174
  %v249 = vadd.f32 %v137, %v248
  %250 = vset.pattern.permute.xlu0 17
  %251 = vperm.xlu0 %250, %v242
  %v252 = vpop.permute.xlu0 %251
  %v254 = vmul.f32 %v252, %v178
  %v255 = vadd.f32 %v249, %v254
  %256 = vset.pattern.permute.xlu0 18
  %257 = vperm.xlu0 %256, %v242
  %v258 = vpop.permute.xlu0 %257
  %v260 = vmul.f32 %v258, %v182
  %v261 = vadd.f32 %v255, %v260
  %262 = vset.pattern.permute.xlu0 19
  %263 = vperm.xlu0 %262, %v242
  %v264 = vpop.permute.xlu0 %263
  %v266 = vmul.f32 %v264, %v186
  %v267 = vadd.f32 %v261, %v266
  %268 = vset.pattern.permute.xlu0 20
  %269 = vperm.xlu0 %268, %v242
  %v270 = vpop.permute.xlu0 %269
  %v272 = vmul.f32 %v270, %v190
  %v273 = vadd.f32 %v267, %v272
  %274 = vset.pattern.permute.xlu0 21
  %275 = vperm.xlu0 %274, %v242
  %v276 = vpop.permute.xlu0 %275
  %v278 = vmul.f32 %v276, %v194
  %v279 = vadd.f32 %v273, %v278
  %280 = vset.pattern.permute.xlu0 22
  %281 = vperm.xlu0 %280, %v242
  %v282 = vpop.permute.xlu0 %281
  %v284 = vmul.f32 %v282, %v198
  %v285 = vadd.f32 %v279, %v284
  %286 = vset.pattern.permute.xlu0 23
  %287 = vperm.xlu0 %286, %v242
  %v288 = vpop.permute.xlu0 %287
  %v290 = vmul.f32 %v288, %v202
  %v291 = vadd.f32 %v285, %v290
  %v292 = vxor.u32 %v291, 2147483648
  %v293 = vmul.f32 %v292, 1.442695
  %v294 = vpow.pop %v293
  %v295 = vadd.f32 %v294, 1.0
  %v296 = vrcp.pop %v295
  %v297 = vmul.f32 1.0, %v296
  %v298 = vtanh.pop %v291
  %v299 = vmul.f32 %v297, %v236
  %301 = vrot.lane.b32.xlu0 %v298, 104
  %v302 = vpop.permute.xlu0 %301
  %v304 = vmul.f32 %v297, %v302
  %306 = vrot.lane.b32.xlu0 %v304, 8
  %v307 = vpop.permute.xlu0 %306
  %v309 = vadd.f32 %v299, %v307
  %v310 = vtanh.pop %v309
  %312 = vrot.lane.b32.xlu0 %v310, 8
  %v313 = vpop.permute.xlu0 %312
  %v315 = vmul.f32 %v297, %v313
  %317 = vset.pattern.permute.xlu0 16
  %318 = vperm.xlu0 %317, %v315
  %v319 = vpop.permute.xlu0 %318
  %v321 = vmul.f32 %v319, %v174
  %v322 = vadd.f32 %v142, %v321
  %323 = vset.pattern.permute.xlu0 17
  %324 = vperm.xlu0 %323, %v315
  %v325 = vpop.permute.xlu0 %324
  %v327 = vmul.f32 %v325, %v178
  %v328 = vadd.f32 %v322, %v327
  %329 = vset.pattern.permute.xlu0 18
  %330 = vperm.xlu0 %329, %v315
  %v331 = vpop.permute.xlu0 %330
  %v333 = vmul.f32 %v331, %v182
  %v334 = vadd.f32 %v328, %v333
  %335 = vset.pattern.permute.xlu0 19
  %336 = vperm.xlu0 %335, %v315
  %v337 = vpop.permute.xlu0 %336
  %v339 = vmul.f32 %v337, %v186
  %v340 = vadd.f32 %v334, %v339
  %341 = vset.pattern.permute.xlu0 20
  %342 = vperm.xlu0 %341, %v315
  %v343 = vpop.permute.xlu0 %342
  %v345 = vmul.f32 %v343, %v190
  %v346 = vadd.f32 %v340, %v345
  %347 = vset.pattern.permute.xlu0 21
  %348 = vperm.xlu0 %347, %v315
  %v349 = vpop.permute.xlu0 %348
  %v351 = vmul.f32 %v349, %v194
  %v352 = vadd.f32 %v346, %v351
  %353 = vset.pattern.permute.xlu0 22
  %354 = vperm.xlu0 %353, %v315
  %v355 = vpop.permute.xlu0 %354
  %v357 = vmul.f32 %v355, %v198
  %v358 = vadd.f32 %v352, %v357
  %359 = vset.pattern.permute.xlu0 23
  %360 = vperm.xlu0 %359, %v315
  %v361 = vpop.permute.xlu0 %360
  %v363 = vmul.f32 %v361, %v202
  %v364 = vadd.f32 %v358, %v363
  %v365 = vxor.u32 %v364, 2147483648
  %v366 = vmul.f32 %v365, 1.442695
  %v367 = vpow.pop %v366
  %v368 = vadd.f32 %v367, 1.0
  %v369 = vrcp.pop %v368
  %v370 = vmul.f32 1.0, %v369
  %v371 = vtanh.pop %v364
  %v372 = vmul.f32 %v370, %v309
  %374 = vrot.lane.b32.xlu0 %v371, 104
  %v375 = vpop.permute.xlu0 %374
  %v377 = vmul.f32 %v370, %v375
  %379 = vrot.lane.b32.xlu0 %v377, 8
  %v380 = vpop.permute.xlu0 %379
  %v382 = vadd.f32 %v372, %v380
  %v383 = vtanh.pop %v382
  %385 = vrot.lane.b32.xlu0 %v383, 8
  %v386 = vpop.permute.xlu0 %385
  %v388 = vmul.f32 %v370, %v386
  %390 = vset.pattern.permute.xlu0 16
  %391 = vperm.xlu0 %390, %v388
  %v392 = vpop.permute.xlu0 %391
  %v394 = vmul.f32 %v392, %v174
  %v395 = vadd.f32 %v147, %v394
  %396 = vset.pattern.permute.xlu0 17
  %397 = vperm.xlu0 %396, %v388
  %v398 = vpop.permute.xlu0 %397
  %v400 = vmul.f32 %v398, %v178
  %v401 = vadd.f32 %v395, %v400
  %402 = vset.pattern.permute.xlu0 18
  %403 = vperm.xlu0 %402, %v388
  %v404 = vpop.permute.xlu0 %403
  %v406 = vmul.f32 %v404, %v182
  %v407 = vadd.f32 %v401, %v406
  %408 = vset.pattern.permute.xlu0 19
  %409 = vperm.xlu0 %408, %v388
  %v410 = vpop.permute.xlu0 %409
  %v412 = vmul.f32 %v410, %v186
  %v413 = vadd.f32 %v407, %v412
  %414 = vset.pattern.permute.xlu0 20
  %415 = vperm.xlu0 %414, %v388
  %v416 = vpop.permute.xlu0 %415
  %v418 = vmul.f32 %v416, %v190
  %v419 = vadd.f32 %v413, %v418
  %420 = vset.pattern.permute.xlu0 21
  %421 = vperm.xlu0 %420, %v388
  %v422 = vpop.permute.xlu0 %421
  %v424 = vmul.f32 %v422, %v194
  %v425 = vadd.f32 %v419, %v424
  %426 = vset.pattern.permute.xlu0 22
  %427 = vperm.xlu0 %426, %v388
  %v428 = vpop.permute.xlu0 %427
  %v430 = vmul.f32 %v428, %v198
  %v431 = vadd.f32 %v425, %v430
  %432 = vset.pattern.permute.xlu0 23
  %433 = vperm.xlu0 %432, %v388
  %v434 = vpop.permute.xlu0 %433
  %v436 = vmul.f32 %v434, %v202
  %v437 = vadd.f32 %v431, %v436
  %v438 = vxor.u32 %v437, 2147483648
  %v439 = vmul.f32 %v438, 1.442695
  %v440 = vpow.pop %v439
  %v441 = vadd.f32 %v440, 1.0
  %v442 = vrcp.pop %v441
  %v443 = vmul.f32 1.0, %v442
  %v444 = vtanh.pop %v437
  %v445 = vmul.f32 %v443, %v382
  %447 = vrot.lane.b32.xlu0 %v444, 104
  %v448 = vpop.permute.xlu0 %447
  %v450 = vmul.f32 %v443, %v448
  %452 = vrot.lane.b32.xlu0 %v450, 8
  %v453 = vpop.permute.xlu0 %452
  %v455 = vadd.f32 %v445, %v453
  %v456 = vtanh.pop %v455
  %458 = vrot.lane.b32.xlu0 %v456, 8
  %v459 = vpop.permute.xlu0 %458
  %v461 = vmul.f32 %v443, %v459
  %463 = vset.pattern.permute.xlu0 16
  %464 = vperm.xlu0 %463, %v461
  %v465 = vpop.permute.xlu0 %464
  %v467 = vmul.f32 %v465, %v174
  %v468 = vadd.f32 %v152, %v467
  %469 = vset.pattern.permute.xlu0 17
  %470 = vperm.xlu0 %469, %v461
  %v471 = vpop.permute.xlu0 %470
  %v473 = vmul.f32 %v471, %v178
  %v474 = vadd.f32 %v468, %v473
  %475 = vset.pattern.permute.xlu0 18
  %476 = vperm.xlu0 %475, %v461
  %v477 = vpop.permute.xlu0 %476
  %v479 = vmul.f32 %v477, %v182
  %v480 = vadd.f32 %v474, %v479
  %481 = vset.pattern.permute.xlu0 19
  %482 = vperm.xlu0 %481, %v461
  %v483 = vpop.permute.xlu0 %482
  %v485 = vmul.f32 %v483, %v186
  %v486 = vadd.f32 %v480, %v485
  %487 = vset.pattern.permute.xlu0 20
  %488 = vperm.xlu0 %487, %v461
  %v489 = vpop.permute.xlu0 %488
  %v491 = vmul.f32 %v489, %v190
  %v492 = vadd.f32 %v486, %v491
  %493 = vset.pattern.permute.xlu0 21
  %494 = vperm.xlu0 %493, %v461
  %v495 = vpop.permute.xlu0 %494
  %v497 = vmul.f32 %v495, %v194
  %v498 = vadd.f32 %v492, %v497
  %499 = vset.pattern.permute.xlu0 22
  %500 = vperm.xlu0 %499, %v461
  %v501 = vpop.permute.xlu0 %500
  %v503 = vmul.f32 %v501, %v198
  %v504 = vadd.f32 %v498, %v503
  %505 = vset.pattern.permute.xlu0 23
  %506 = vperm.xlu0 %505, %v461
  %v507 = vpop.permute.xlu0 %506
  %v509 = vmul.f32 %v507, %v202
  %v510 = vadd.f32 %v504, %v509
  %v511 = vxor.u32 %v510, 2147483648
  %v512 = vmul.f32 %v511, 1.442695
  %v513 = vpow.pop %v512
  %v514 = vadd.f32 %v513, 1.0
  %v515 = vrcp.pop %v514
  %v516 = vmul.f32 1.0, %v515
  %v517 = vtanh.pop %v510
  %v518 = vmul.f32 %v516, %v455
  %520 = vrot.lane.b32.xlu0 %v517, 104
  %v521 = vpop.permute.xlu0 %520
  %v523 = vmul.f32 %v516, %v521
  %525 = vrot.lane.b32.xlu0 %v523, 8
  %v526 = vpop.permute.xlu0 %525
  %v528 = vadd.f32 %v518, %v526
  %v529 = vtanh.pop %v528
  %531 = vrot.lane.b32.xlu0 %v529, 8
  %v532 = vpop.permute.xlu0 %531
  %v534 = vmul.f32 %v516, %v532
  %536 = vset.pattern.permute.xlu0 16
  %537 = vperm.xlu0 %536, %v534
  %v538 = vpop.permute.xlu0 %537
  %v540 = vmul.f32 %v538, %v174
  %v541 = vadd.f32 %v157, %v540
  %542 = vset.pattern.permute.xlu0 17
  %543 = vperm.xlu0 %542, %v534
  %v544 = vpop.permute.xlu0 %543
  %v546 = vmul.f32 %v544, %v178
  %v547 = vadd.f32 %v541, %v546
  %548 = vset.pattern.permute.xlu0 18
  %549 = vperm.xlu0 %548, %v534
  %v550 = vpop.permute.xlu0 %549
  %v552 = vmul.f32 %v550, %v182
  %v553 = vadd.f32 %v547, %v552
  %554 = vset.pattern.permute.xlu0 19
  %555 = vperm.xlu0 %554, %v534
  %v556 = vpop.permute.xlu0 %555
  %v558 = vmul.f32 %v556, %v186
  %v559 = vadd.f32 %v553, %v558
  %560 = vset.pattern.permute.xlu0 20
  %561 = vperm.xlu0 %560, %v534
  %v562 = vpop.permute.xlu0 %561
  %v564 = vmul.f32 %v562, %v190
  %v565 = vadd.f32 %v559, %v564
  %566 = vset.pattern.permute.xlu0 21
  %567 = vperm.xlu0 %566, %v534
  %v568 = vpop.permute.xlu0 %567
  %v570 = vmul.f32 %v568, %v194
  %v571 = vadd.f32 %v565, %v570
  %572 = vset.pattern.permute.xlu0 22
  %573 = vperm.xlu0 %572, %v534
  %v574 = vpop.permute.xlu0 %573
  %v576 = vmul.f32 %v574, %v198
  %v577 = vadd.f32 %v571, %v576
  %578 = vset.pattern.permute.xlu0 23
  %579 = vperm.xlu0 %578, %v534
  %v580 = vpop.permute.xlu0 %579
  %v582 = vmul.f32 %v580, %v202
  %v583 = vadd.f32 %v577, %v582
  %v584 = vxor.u32 %v583, 2147483648
  %v585 = vmul.f32 %v584, 1.442695
  %v586 = vpow.pop %v585
  %v587 = vadd.f32 %v586, 1.0
  %v588 = vrcp.pop %v587
  %v589 = vmul.f32 1.0, %v588
  %v590 = vtanh.pop %v583
  %v591 = vmul.f32 %v589, %v528
  %593 = vrot.lane.b32.xlu0 %v590, 104
  %v594 = vpop.permute.xlu0 %593
  %v596 = vmul.f32 %v589, %v594
  %598 = vrot.lane.b32.xlu0 %v596, 8
  %v599 = vpop.permute.xlu0 %598
  %v601 = vadd.f32 %v591, %v599
  %v602 = vtanh.pop %v601
  %604 = vrot.lane.b32.xlu0 %v602, 8
  %v605 = vpop.permute.xlu0 %604
  %v607 = vmul.f32 %v589, %v605
  %609 = vset.pattern.permute.xlu0 16
  %610 = vperm.xlu0 %609, %v607
  %v611 = vpop.permute.xlu0 %610
  %v613 = vmul.f32 %v611, %v174
  %v614 = vadd.f32 %v162, %v613
  %615 = vset.pattern.permute.xlu0 17
  %616 = vperm.xlu0 %615, %v607
  %v617 = vpop.permute.xlu0 %616
  %v619 = vmul.f32 %v617, %v178
  %v620 = vadd.f32 %v614, %v619
  %621 = vset.pattern.permute.xlu0 18
  %622 = vperm.xlu0 %621, %v607
  %v623 = vpop.permute.xlu0 %622
  %v625 = vmul.f32 %v623, %v182
  %v626 = vadd.f32 %v620, %v625
  %627 = vset.pattern.permute.xlu0 19
  %628 = vperm.xlu0 %627, %v607
  %v629 = vpop.permute.xlu0 %628
  %v631 = vmul.f32 %v629, %v186
  %v632 = vadd.f32 %v626, %v631
  %633 = vset.pattern.permute.xlu0 20
  %634 = vperm.xlu0 %633, %v607
  %v635 = vpop.permute.xlu0 %634
  %v637 = vmul.f32 %v635, %v190
  %v638 = vadd.f32 %v632, %v637
  %639 = vset.pattern.permute.xlu0 21
  %640 = vperm.xlu0 %639, %v607
  %v641 = vpop.permute.xlu0 %640
  %v643 = vmul.f32 %v641, %v194
  %v644 = vadd.f32 %v638, %v643
  %645 = vset.pattern.permute.xlu0 22
  %646 = vperm.xlu0 %645, %v607
  %v647 = vpop.permute.xlu0 %646
  %v649 = vmul.f32 %v647, %v198
  %v650 = vadd.f32 %v644, %v649
  %651 = vset.pattern.permute.xlu0 23
  %652 = vperm.xlu0 %651, %v607
  %v653 = vpop.permute.xlu0 %652
  %v655 = vmul.f32 %v653, %v202
  %v656 = vadd.f32 %v650, %v655
  %v657 = vxor.u32 %v656, 2147483648
  %v658 = vmul.f32 %v657, 1.442695
  %v659 = vpow.pop %v658
  %v660 = vadd.f32 %v659, 1.0
  %v661 = vrcp.pop %v660
  %v662 = vmul.f32 1.0, %v661
  %v663 = vtanh.pop %v656
  %v664 = vmul.f32 %v662, %v601
  %666 = vrot.lane.b32.xlu0 %v663, 104
  %v667 = vpop.permute.xlu0 %666
  %v669 = vmul.f32 %v662, %v667
  %671 = vrot.lane.b32.xlu0 %v669, 8
  %v672 = vpop.permute.xlu0 %671
  %v674 = vadd.f32 %v664, %v672
  %v675 = vtanh.pop %v674
  %677 = vrot.lane.b32.xlu0 %v675, 8
  %v678 = vpop.permute.xlu0 %677
  %v680 = vmul.f32 %v662, %v678
  %682 = vset.pattern.permute.xlu0 16
  %683 = vperm.xlu0 %682, %v680
  %v684 = vpop.permute.xlu0 %683
  %v686 = vmul.f32 %v684, %v174
  %v687 = vadd.f32 %v167, %v686
  %688 = vset.pattern.permute.xlu0 17
  %689 = vperm.xlu0 %688, %v680
  %v690 = vpop.permute.xlu0 %689
  %v692 = vmul.f32 %v690, %v178
  %v693 = vadd.f32 %v687, %v692
  %694 = vset.pattern.permute.xlu0 18
  %695 = vperm.xlu0 %694, %v680
  %v696 = vpop.permute.xlu0 %695
  %v698 = vmul.f32 %v696, %v182
  %v699 = vadd.f32 %v693, %v698
  %700 = vset.pattern.permute.xlu0 19
  %701 = vperm.xlu0 %700, %v680
  %v702 = vpop.permute.xlu0 %701
  %v704 = vmul.f32 %v702, %v186
  %v705 = vadd.f32 %v699, %v704
  %706 = vset.pattern.permute.xlu0 20
  %707 = vperm.xlu0 %706, %v680
  %v708 = vpop.permute.xlu0 %707
  %v710 = vmul.f32 %v708, %v190
  %v711 = vadd.f32 %v705, %v710
  %712 = vset.pattern.permute.xlu0 21
  %713 = vperm.xlu0 %712, %v680
  %v714 = vpop.permute.xlu0 %713
  %v716 = vmul.f32 %v714, %v194
  %v717 = vadd.f32 %v711, %v716
  %718 = vset.pattern.permute.xlu0 22
  %719 = vperm.xlu0 %718, %v680
  %v720 = vpop.permute.xlu0 %719
  %v722 = vmul.f32 %v720, %v198
  %v723 = vadd.f32 %v717, %v722
  %724 = vset.pattern.permute.xlu0 23
  %725 = vperm.xlu0 %724, %v680
  %v726 = vpop.permute.xlu0 %725
  %v728 = vmul.f32 %v726, %v202
  %v729 = vadd.f32 %v723, %v728
  %v730 = vxor.u32 %v729, 2147483648
  %v731 = vmul.f32 %v730, 1.442695
  %v732 = vpow.pop %v731
  %v733 = vadd.f32 %v732, 1.0
  %v734 = vrcp.pop %v733
  %v735 = vmul.f32 1.0, %v734
  %v736 = vtanh.pop %v729
  %v737 = vmul.f32 %v735, %v674
  %739 = vrot.lane.b32.xlu0 %v736, 104
  %v740 = vpop.permute.xlu0 %739
  %v742 = vmul.f32 %v735, %v740
  %744 = vrot.lane.b32.xlu0 %v742, 8
  %v745 = vpop.permute.xlu0 %744
  %v747 = vadd.f32 %v737, %v745
  %v748 = vtanh.pop %v747
  %750 = vrot.lane.b32.xlu0 %v748, 8
  %v751 = vpop.permute.xlu0 %750
  %v753 = vmul.f32 %v735, %v751
  %755 = vrot.lane.b32.xlu0 %v242, 112
  %v756 = vpop.permute.xlu0 %755
  %757 = vrot.lane.b32.xlu0 %v315, 112
  %v758 = vpop.permute.xlu0 %757
  %759 = vrot.lane.b32.xlu0 %v388, 112
  %v760 = vpop.permute.xlu0 %759
  %761 = vrot.lane.b32.xlu0 %v461, 112
  %v762 = vpop.permute.xlu0 %761
  %763 = vrot.lane.b32.xlu0 %v534, 112
  %v764 = vpop.permute.xlu0 %763
  %765 = vrot.lane.b32.xlu0 %v607, 112
  %v766 = vpop.permute.xlu0 %765
  %767 = vrot.lane.b32.xlu0 %v680, 112
  %v768 = vpop.permute.xlu0 %767
  %769 = vrot.lane.b32.xlu0 %v753, 112
  %v770 = vpop.permute.xlu0 %769
  %vm779 = vcmask 64512
  %780 = vst.msk [vmem:[%s4] sm:$0xff] %vm779, %v756
  %781 = vst.msk [vmem:[%s4 + $0x8] sm:$0xff] %vm779, %v758
  %782 = vst.msk [vmem:[%s4 + $0x10] sm:$0xff] %vm779, %v760
  %783 = vst.msk [vmem:[%s4 + $0x18] sm:$0xff] %vm779, %v762
  %784 = vst.msk [vmem:[%s4 + $0x20] sm:$0xff] %vm779, %v764
  %785 = vst.msk [vmem:[%s4 + $0x28] sm:$0xff] %vm779, %v766
  %786 = vst.msk [vmem:[%s4 + $0x30] sm:$0xff] %vm779, %v768
  %787 = vst.msk [vmem:[%s4 + $0x38] sm:$0xff] %vm779, %v770
  %788 = vst.msk [vmem:[%s5] sm:$0xff] %vm779, %v770
  %790 = vrot.lane.b32.xlu0 %v747, 120
  %v791 = vpop.permute.xlu0 %790
  %793 = vst.msk [vmem:[%s6] sm:$0xff] %vm779, %v791
  // Predicated region
  $region18: #{lstm_encoder_pallas.1} parent=0 // pred_check
    _
  $region19: #{lstm_encoder_pallas.1} parent=0 // pred_check_branch
    %795 = sbr.rel (0) target = $region21
  $region20: #{lstm_encoder_pallas.1} parent=0 // pred_region
    _
  $region21: #{lstm_encoder_pallas.1} parent=0 // pred_fallthru
    _
  // Predicated region
  $region22: #{lstm_encoder_pallas.1} parent=0 // pred_check
    _
  $region23: #{lstm_encoder_pallas.1} parent=0 // pred_check_branch
    %797 = sbr.rel (0) target = $region25
  $region24: #{lstm_encoder_pallas.1} parent=0 // pred_region
    _
  $region25: #{lstm_encoder_pallas.1} parent=0 // pred_fallthru
    _
  // Predicated region
  $region26: #{lstm_encoder_pallas.1} parent=0 // pred_check
    _
  $region27: #{lstm_encoder_pallas.1} parent=0 // pred_check_branch
    %799 = sbr.rel (0) target = $region29
  $region28: #{lstm_encoder_pallas.1} parent=0 // pred_region
    _
  $region29: #{lstm_encoder_pallas.1} parent=0 // pred_fallthru
    _
  // Predicated region
  $region30: #{lstm_encoder_pallas.1} parent=0 // pred_check
    _
  $region31: #{lstm_encoder_pallas.1} parent=0 // pred_check_branch
    %801 = sbr.rel (0) target = $region33
  $region32: #{lstm_encoder_pallas.1} parent=0 // pred_region
    _
  $region33: #{lstm_encoder_pallas.1} parent=0 // pred_fallthru
    _
  // Predicated region
  $region34: #{lstm_encoder_pallas.1} parent=0 // pred_check
    _
  $region35: #{lstm_encoder_pallas.1} parent=0 // pred_check_branch
    %803 = sbr.rel (0) target = $region37
  $region36: #{lstm_encoder_pallas.1} parent=0 // pred_region
    _
  $region37: #{lstm_encoder_pallas.1} parent=0 // pred_fallthru
    _
  // Predicated region
  $region38: #{lstm_encoder_pallas.1} parent=0 // pred_check
    _
  $region39: #{lstm_encoder_pallas.1} parent=0 // pred_check_branch
    %805 = sbr.rel (0) target = $region41
  $region40: #{lstm_encoder_pallas.1} parent=0 // pred_region
    _
  $region41: #{lstm_encoder_pallas.1} parent=0 // pred_fallthru
    _

</llo_original>
